<compile_context>
chip_gen: v7x
topology: tpu7x:2x2x1
jax: 0.10.0
libtpu: 0.0.40
codegen_flags: <defaults>
</compile_context>

<pallas_src>
import functools

import jax
import jax.numpy as jnp
from jax.experimental import pallas as pl
from jax.experimental.pallas import tpu as pltpu


def _softplus(x):
    # Stable, branch-free softplus; equivalent (to < 1 ulp at f32) to
    # torch.nn.Softplus(beta=1, threshold=20).
    return jnp.maximum(x, 0.0) + jnp.log1p(jnp.exp(-jnp.abs(x)))


def _mlp_kernel(x_ref,
                w1_ref, b1_ref,
                w2_ref, b2_ref,
                w3_ref, b3_ref,
                w4_ref, b4_ref,
                w5_ref, b5_ref,
                o_ref):
    """Fused 5-layer MLP; transposed layout: activations are [features, block_b]."""
    h = x_ref[...].astype(jnp.float32)                                        # [4,  bb]

    h = _softplus(jnp.dot(w1_ref[...], h,
                          preferred_element_type=jnp.float32) + b1_ref[...])  # [H, bb]
    h = _softplus(jnp.dot(w2_ref[...], h,
                          preferred_element_type=jnp.float32) + b2_ref[...])  # [H, bb]
    h = _softplus(jnp.dot(w3_ref[...], h,
                          preferred_element_type=jnp.float32) + b3_ref[...])  # [H, bb]
    h = _softplus(jnp.dot(w4_ref[...], h,
                          preferred_element_type=jnp.float32) + b4_ref[...])  # [H, bb]
    y = jnp.dot(w5_ref[...], h,
                preferred_element_type=jnp.float32) + b5_ref[...]             # [2, bb]

    o_ref[...] = y.astype(o_ref.dtype)


def _whole(shape):
    """Whole-array block with a constant index map (stays resident in VMEM)."""
    nd = len(shape)
    return pl.BlockSpec(shape, lambda i, _nd=nd: (0,) * _nd)


@functools.partial(jax.jit, static_argnames=("block_b",))
def classical_nn_forward(x, params, block_b=512):
    """x: [B, 4] float32 -> [B, 2] float32.

    block_b: max batch tile width (multiple of 128; batch maps to the 128-lane axis).
    The effective tile is shrunk for small batches to avoid wasted padded compute.
    """
    (w1, b1), (w2, b2), (w3, b3), (w4, b4), (w5, b5) = params
    B = x.shape[0]
    H = w1.shape[0]

    # Effective tile: multiple of 128, no larger than needed to cover B, capped by block_b.
    bb = min(block_b, ((B + 127) // 128) * 128)
    bb = max(bb, 128)

    # Pad the batch up to a multiple of bb and work on the transposed [4, Bp] slab.
    Bp = ((B + bb - 1) // bb) * bb
    x_t = x.astype(jnp.float32).T                                             # [4, B]
    if Bp != B:
        x_t = jnp.pad(x_t, ((0, 0), (0, Bp - B)))

    grid = (Bp // bb,)
    out_t = pl.pallas_call(
        _mlp_kernel,
        out_shape=jax.ShapeDtypeStruct((2, Bp), jnp.float32),
        grid_spec=pltpu.PrefetchScalarGridSpec(
            num_scalar_prefetch=0,
            grid=grid,
            in_specs=[
                pl.BlockSpec((4, bb), lambda i: (0, i)),        # x tile (batch on lanes)
                _whole((H, 4)), _whole((H, 1)),                 # layer 1  W[out,in], b[out,1]
                _whole((H, H)), _whole((H, 1)),                 # layer 2
                _whole((H, H)), _whole((H, 1)),                 # layer 3
                _whole((H, H)), _whole((H, 1)),                 # layer 4
                _whole((2, H)), _whole((2, 1)),                 # layer 5
            ],
            out_specs=pl.BlockSpec((2, bb), lambda i: (0, i)),
        ),
        compiler_params=pltpu.CompilerParams(
            dimension_semantics=("parallel",),
        ),
    )(x_t, w1, b1, w2, b2, w3, b3, w4, b4, w5, b5)

    return out_t[:, :B].T                                                     # [B, 2]


def init_params(key, hidden_dimensions=32):
    """Deterministic init mimicking PyTorch nn.Linear default (uniform +/- 1/sqrt(fan_in)).

    Weights are stored PyTorch-native [out_features, in_features]; biases as
    [out_features, 1] so they broadcast over the lane (batch) axis inside the kernel.
    """
    dims = [4, hidden_dimensions, hidden_dimensions, hidden_dimensions,
            hidden_dimensions, 2]
    params = []
    for fan_in, fan_out in zip(dims[:-1], dims[1:]):
        key, kw, kb = jax.random.split(key, 3)
        bound = 1.0 / jnp.sqrt(fan_in)
        w = jax.random.uniform(kw, (fan_out, fan_in), jnp.float32, -bound, bound)
        b = jax.random.uniform(kb, (fan_out, 1), jnp.float32, -bound, bound)
        params.append((w, b))
    return params


def reference_forward(x, params):
    """Pure-JAX reference (uses torch's thresholded softplus form) for checking."""
    h = x
    for i, (w, b) in enumerate(params):
        h = h @ w.T + b[:, 0]
        if i < len(params) - 1:
            stable = jnp.maximum(h, 0.0) + jnp.log1p(jnp.exp(-jnp.abs(h)))
            h = jnp.where(h > 20.0, h, stable)
    return h


if __name__ == "__main__":
    key = jax.random.PRNGKey(0)
    key, kx = jax.random.split(key)

    B, H, BLOCK_B = 1024, 32, 512   # grid = (2,): exercises tiling + v7x megacore sharding
    # Input x = (q0, q1, q0_t, q1_t) per row -> shape [B, 4]
    x = jax.random.normal(kx, (B, 4), dtype=jnp.float32)

    params = init_params(key, hidden_dimensions=H)

    out = classical_nn_forward(x, params, block_b=BLOCK_B)
    out = jax.block_until_ready(out)

    ref = reference_forward(x, params)
    assert out.shape == (B, 2)
    assert jnp.allclose(out, ref, atol=1e-5, rtol=1e-5), "mismatch vs reference"

    # Padding path (B not a multiple of the batch tile).
    x_odd = x[: B - 37]
    out_odd = jax.block_until_ready(classical_nn_forward(x_odd, params, block_b=BLOCK_B))
    assert jnp.allclose(out_odd, ref[: B - 37], atol=1e-5, rtol=1e-5), "padding mismatch"

    # Tiny-batch path (effective tile auto-shrinks to 128).
    x_tiny = x[:2]
    out_tiny = jax.block_until_ready(classical_nn_forward(x_tiny, params, block_b=BLOCK_B))
    assert jnp.allclose(out_tiny, ref[:2], atol=1e-5, rtol=1e-5), "tiny-batch mismatch"

    print("KERNEL_OK")
</pallas_src>

<mosaic_0001>
module attributes {stable_mosaic.version = 11 : i64} {
  func.func @_mlp_kernel(%arg0: i32, %arg1: memref<4x512xf32, #tpu.memory_space<vmem>>, %arg2: memref<32x4xf32, #tpu.memory_space<vmem>>, %arg3: memref<32x1xf32, #tpu.memory_space<vmem>>, %arg4: memref<32x32xf32, #tpu.memory_space<vmem>>, %arg5: memref<32x1xf32, #tpu.memory_space<vmem>>, %arg6: memref<32x32xf32, #tpu.memory_space<vmem>>, %arg7: memref<32x1xf32, #tpu.memory_space<vmem>>, %arg8: memref<32x32xf32, #tpu.memory_space<vmem>>, %arg9: memref<32x1xf32, #tpu.memory_space<vmem>>, %arg10: memref<2x32xf32, #tpu.memory_space<vmem>>, %arg11: memref<2x1xf32, #tpu.memory_space<vmem>>, %arg12: memref<2x512xf32, #tpu.memory_space<vmem>>) attributes {dimension_semantics = [#tpu.dimension_semantics<parallel>], iteration_bounds = array<i64: 2>, scalar_prefetch = 0 : i64, scratch_operands = 0 : i64, tpu.core_type = #tpu.core_type<tc>, window_params = [{transform_indices = @transform_0, window_bounds = array<i64: 4, 512>}, {pipeline_mode = #tpu.pipeline_mode<synchronous>, transform_indices = @transform_1, window_bounds = array<i64: 32, 4>}, {pipeline_mode = #tpu.pipeline_mode<synchronous>, transform_indices = @transform_2, window_bounds = array<i64: 32, 1>}, {pipeline_mode = #tpu.pipeline_mode<synchronous>, transform_indices = @transform_3, window_bounds = array<i64: 32, 32>}, {pipeline_mode = #tpu.pipeline_mode<synchronous>, transform_indices = @transform_4, window_bounds = array<i64: 32, 1>}, {pipeline_mode = #tpu.pipeline_mode<synchronous>, transform_indices = @transform_5, window_bounds = array<i64: 32, 32>}, {pipeline_mode = #tpu.pipeline_mode<synchronous>, transform_indices = @transform_6, window_bounds = array<i64: 32, 1>}, {pipeline_mode = #tpu.pipeline_mode<synchronous>, transform_indices = @transform_7, window_bounds = array<i64: 32, 32>}, {pipeline_mode = #tpu.pipeline_mode<synchronous>, transform_indices = @transform_8, window_bounds = array<i64: 32, 1>}, {pipeline_mode = #tpu.pipeline_mode<synchronous>, transform_indices = @transform_9, window_bounds = array<i64: 2, 32>}, {pipeline_mode = #tpu.pipeline_mode<synchronous>, transform_indices = @transform_10, window_bounds = array<i64: 2, 1>}, {transform_indices = @transform_11, window_bounds = array<i64: 2, 512>}]} {
    %c0 = arith.constant 0 : index
    %c0_0 = arith.constant 0 : index
    %0 = vector.load %arg1[%c0, %c0_0] : memref<4x512xf32, #tpu.memory_space<vmem>>, vector<4x512xf32>
    %c0_1 = arith.constant 0 : index
    %c0_2 = arith.constant 0 : index
    %1 = vector.load %arg2[%c0_1, %c0_2] : memref<32x4xf32, #tpu.memory_space<vmem>>, vector<32x4xf32>
    %cst = arith.constant dense<0.000000e+00> : vector<32x512xf32>
    %2 = tpu.matmul %1, %0, %cst {dimension_numbers = #tpu.dot_dimension_numbers<[1], [0], [0], [1], [0, 0, 1, 1], [], []>} : vector<32x4xf32>, vector<4x512xf32>, vector<32x512xf32> -> vector<32x512xf32>
    %c0_3 = arith.constant 0 : index
    %c0_4 = arith.constant 0 : index
    %3 = vector.load %arg3[%c0_3, %c0_4] : memref<32x1xf32, #tpu.memory_space<vmem>>, vector<32x1xf32>
    %4 = vector.broadcast %3 : vector<32x1xf32> to vector<32x512xf32>
    %5 = arith.addf %2, %4 : vector<32x512xf32>
    %cst_5 = arith.constant 0.000000e+00 : f32
    %6 = vector.broadcast %cst_5 : f32 to vector<32x512xf32>
    %7 = arith.maximumf %5, %6 : vector<32x512xf32>
    %8 = math.absf %5 : vector<32x512xf32>
    %cst_6 = arith.constant 0.000000e+00 : f32
    %9 = vector.broadcast %cst_6 : f32 to vector<32x512xf32>
    %10 = arith.subf %9, %8 : vector<32x512xf32>
    %11 = math.exp %10 : vector<32x512xf32>
    %12 = math.log1p %11 : vector<32x512xf32>
    %13 = arith.addf %7, %12 : vector<32x512xf32>
    %c0_7 = arith.constant 0 : index
    %c0_8 = arith.constant 0 : index
    %14 = vector.load %arg4[%c0_7, %c0_8] : memref<32x32xf32, #tpu.memory_space<vmem>>, vector<32x32xf32>
    %cst_9 = arith.constant dense<0.000000e+00> : vector<32x512xf32>
    %15 = tpu.matmul %14, %13, %cst_9 {dimension_numbers = #tpu.dot_dimension_numbers<[1], [0], [0], [1], [0, 0, 1, 1], [], []>} : vector<32x32xf32>, vector<32x512xf32>, vector<32x512xf32> -> vector<32x512xf32>
    %c0_10 = arith.constant 0 : index
    %c0_11 = arith.constant 0 : index
    %16 = vector.load %arg5[%c0_10, %c0_11] : memref<32x1xf32, #tpu.memory_space<vmem>>, vector<32x1xf32>
    %17 = vector.broadcast %16 : vector<32x1xf32> to vector<32x512xf32>
    %18 = arith.addf %15, %17 : vector<32x512xf32>
    %cst_12 = arith.constant 0.000000e+00 : f32
    %19 = vector.broadcast %cst_12 : f32 to vector<32x512xf32>
    %20 = arith.maximumf %18, %19 : vector<32x512xf32>
    %21 = math.absf %18 : vector<32x512xf32>
    %cst_13 = arith.constant 0.000000e+00 : f32
    %22 = vector.broadcast %cst_13 : f32 to vector<32x512xf32>
    %23 = arith.subf %22, %21 : vector<32x512xf32>
    %24 = math.exp %23 : vector<32x512xf32>
    %25 = math.log1p %24 : vector<32x512xf32>
    %26 = arith.addf %20, %25 : vector<32x512xf32>
    %c0_14 = arith.constant 0 : index
    %c0_15 = arith.constant 0 : index
    %27 = vector.load %arg6[%c0_14, %c0_15] : memref<32x32xf32, #tpu.memory_space<vmem>>, vector<32x32xf32>
    %cst_16 = arith.constant dense<0.000000e+00> : vector<32x512xf32>
    %28 = tpu.matmul %27, %26, %cst_16 {dimension_numbers = #tpu.dot_dimension_numbers<[1], [0], [0], [1], [0, 0, 1, 1], [], []>} : vector<32x32xf32>, vector<32x512xf32>, vector<32x512xf32> -> vector<32x512xf32>
    %c0_17 = arith.constant 0 : index
    %c0_18 = arith.constant 0 : index
    %29 = vector.load %arg7[%c0_17, %c0_18] : memref<32x1xf32, #tpu.memory_space<vmem>>, vector<32x1xf32>
    %30 = vector.broadcast %29 : vector<32x1xf32> to vector<32x512xf32>
    %31 = arith.addf %28, %30 : vector<32x512xf32>
    %cst_19 = arith.constant 0.000000e+00 : f32
    %32 = vector.broadcast %cst_19 : f32 to vector<32x512xf32>
    %33 = arith.maximumf %31, %32 : vector<32x512xf32>
    %34 = math.absf %31 : vector<32x512xf32>
    %cst_20 = arith.constant 0.000000e+00 : f32
    %35 = vector.broadcast %cst_20 : f32 to vector<32x512xf32>
    %36 = arith.subf %35, %34 : vector<32x512xf32>
    %37 = math.exp %36 : vector<32x512xf32>
    %38 = math.log1p %37 : vector<32x512xf32>
    %39 = arith.addf %33, %38 : vector<32x512xf32>
    %c0_21 = arith.constant 0 : index
    %c0_22 = arith.constant 0 : index
    %40 = vector.load %arg8[%c0_21, %c0_22] : memref<32x32xf32, #tpu.memory_space<vmem>>, vector<32x32xf32>
    %cst_23 = arith.constant dense<0.000000e+00> : vector<32x512xf32>
    %41 = tpu.matmul %40, %39, %cst_23 {dimension_numbers = #tpu.dot_dimension_numbers<[1], [0], [0], [1], [0, 0, 1, 1], [], []>} : vector<32x32xf32>, vector<32x512xf32>, vector<32x512xf32> -> vector<32x512xf32>
    %c0_24 = arith.constant 0 : index
    %c0_25 = arith.constant 0 : index
    %42 = vector.load %arg9[%c0_24, %c0_25] : memref<32x1xf32, #tpu.memory_space<vmem>>, vector<32x1xf32>
    %43 = vector.broadcast %42 : vector<32x1xf32> to vector<32x512xf32>
    %44 = arith.addf %41, %43 : vector<32x512xf32>
    %cst_26 = arith.constant 0.000000e+00 : f32
    %45 = vector.broadcast %cst_26 : f32 to vector<32x512xf32>
    %46 = arith.maximumf %44, %45 : vector<32x512xf32>
    %47 = math.absf %44 : vector<32x512xf32>
    %cst_27 = arith.constant 0.000000e+00 : f32
    %48 = vector.broadcast %cst_27 : f32 to vector<32x512xf32>
    %49 = arith.subf %48, %47 : vector<32x512xf32>
    %50 = math.exp %49 : vector<32x512xf32>
    %51 = math.log1p %50 : vector<32x512xf32>
    %52 = arith.addf %46, %51 : vector<32x512xf32>
    %c0_28 = arith.constant 0 : index
    %c0_29 = arith.constant 0 : index
    %53 = vector.load %arg10[%c0_28, %c0_29] : memref<2x32xf32, #tpu.memory_space<vmem>>, vector<2x32xf32>
    %cst_30 = arith.constant dense<0.000000e+00> : vector<2x512xf32>
    %54 = tpu.matmul %53, %52, %cst_30 {dimension_numbers = #tpu.dot_dimension_numbers<[1], [0], [0], [1], [0, 0, 1, 1], [], []>} : vector<2x32xf32>, vector<32x512xf32>, vector<2x512xf32> -> vector<2x512xf32>
    %c0_31 = arith.constant 0 : index
    %c0_32 = arith.constant 0 : index
    %55 = vector.load %arg11[%c0_31, %c0_32] : memref<2x1xf32, #tpu.memory_space<vmem>>, vector<2x1xf32>
    %56 = vector.broadcast %55 : vector<2x1xf32> to vector<2x512xf32>
    %57 = arith.addf %54, %56 : vector<2x512xf32>
    %c0_33 = arith.constant 0 : index
    %c0_34 = arith.constant 0 : index
    %58 = vector.load %arg12[%c0_33, %c0_34] : memref<2x512xf32, #tpu.memory_space<vmem>>, vector<2x512xf32>
    tpu.vector_store %arg12[%c0_33, %c0_34], %57 {strides = array<i32>} : memref<2x512xf32, #tpu.memory_space<vmem>>, vector<2x512xf32>,
    return
  }
  func.func @transform_0(%arg0: i32) -> (i32, i32) {
    %c0_i32 = arith.constant 0 : i32
    %c0_i32_0 = arith.constant 0 : i32
    return %c0_i32, %arg0 : i32, i32
  }
  func.func @transform_1(%arg0: i32) -> (i32, i32) {
    %c0_i32 = arith.constant 0 : i32
    %c0_i32_0 = arith.constant 0 : i32
    %c0_i32_1 = arith.constant 0 : i32
    return %c0_i32, %c0_i32_0 : i32, i32
  }
  func.func @transform_2(%arg0: i32) -> (i32, i32) {
    %c0_i32 = arith.constant 0 : i32
    %c0_i32_0 = arith.constant 0 : i32
    %c0_i32_1 = arith.constant 0 : i32
    return %c0_i32, %c0_i32_0 : i32, i32
  }
  func.func @transform_3(%arg0: i32) -> (i32, i32) {
    %c0_i32 = arith.constant 0 : i32
    %c0_i32_0 = arith.constant 0 : i32
    %c0_i32_1 = arith.constant 0 : i32
    return %c0_i32, %c0_i32_0 : i32, i32
  }
  func.func @transform_4(%arg0: i32) -> (i32, i32) {
    %c0_i32 = arith.constant 0 : i32
    %c0_i32_0 = arith.constant 0 : i32
    %c0_i32_1 = arith.constant 0 : i32
    return %c0_i32, %c0_i32_0 : i32, i32
  }
  func.func @transform_5(%arg0: i32) -> (i32, i32) {
    %c0_i32 = arith.constant 0 : i32
    %c0_i32_0 = arith.constant 0 : i32
    %c0_i32_1 = arith.constant 0 : i32
    return %c0_i32, %c0_i32_0 : i32, i32
  }
  func.func @transform_6(%arg0: i32) -> (i32, i32) {
    %c0_i32 = arith.constant 0 : i32
    %c0_i32_0 = arith.constant 0 : i32
    %c0_i32_1 = arith.constant 0 : i32
    return %c0_i32, %c0_i32_0 : i32, i32
  }
  func.func @transform_7(%arg0: i32) -> (i32, i32) {
    %c0_i32 = arith.constant 0 : i32
    %c0_i32_0 = arith.constant 0 : i32
    %c0_i32_1 = arith.constant 0 : i32
    return %c0_i32, %c0_i32_0 : i32, i32
  }
  func.func @transform_8(%arg0: i32) -> (i32, i32) {
    %c0_i32 = arith.constant 0 : i32
    %c0_i32_0 = arith.constant 0 : i32
    %c0_i32_1 = arith.constant 0 : i32
    return %c0_i32, %c0_i32_0 : i32, i32
  }
  func.func @transform_9(%arg0: i32) -> (i32, i32) {
    %c0_i32 = arith.constant 0 : i32
    %c0_i32_0 = arith.constant 0 : i32
    %c0_i32_1 = arith.constant 0 : i32
    return %c0_i32, %c0_i32_0 : i32, i32
  }
  func.func @transform_10(%arg0: i32) -> (i32, i32) {
    %c0_i32 = arith.constant 0 : i32
    %c0_i32_0 = arith.constant 0 : i32
    %c0_i32_1 = arith.constant 0 : i32
    return %c0_i32, %c0_i32_0 : i32, i32
  }
  func.func @transform_11(%arg0: i32) -> (i32, i32) {
    %c0_i32 = arith.constant 0 : i32
    %c0_i32_0 = arith.constant 0 : i32
    return %c0_i32, %arg0 : i32, i32
  }
}

</mosaic_0001>

<llo_original>
// kernel: classical_nn_forward.1
$region0: #{classical_nn_forward.1}
  #allocation0 [shape = 'u32[]', space=smem, size = 0x4, offset = 0x4, fixed_abs, tag = 'smem constant byte address 0x4 - core index']
  #allocation1 [shape = 'u32[144,128]{1,0:T(1,128)}', space=vmem, size = 0x12000, scoped, tag = 'internal scratch']
  %s0 = inlined_call_operand.vmem [shape: f32[4,1024], index: 0, kind: input, shape index: {}]
  %s1 = inlined_call_operand.vmem [shape: f32[32,4], index: 1, kind: input, shape index: {}]
  %s2 = inlined_call_operand.vmem [shape: f32[32,1], index: 2, kind: input, shape index: {}]
  %s3 = inlined_call_operand.vmem [shape: f32[32,32], index: 3, kind: input, shape index: {}]
  %s4 = inlined_call_operand.vmem [shape: f32[32,1], index: 4, kind: input, shape index: {}]
  %s5 = inlined_call_operand.vmem [shape: f32[32,32], index: 5, kind: input, shape index: {}]
  %s6 = inlined_call_operand.vmem [shape: f32[32,1], index: 6, kind: input, shape index: {}]
  %s7 = inlined_call_operand.vmem [shape: f32[32,32], index: 7, kind: input, shape index: {}]
  %s8 = inlined_call_operand.vmem [shape: f32[32,1], index: 8, kind: input, shape index: {}]
  %s9 = inlined_call_operand.vmem [shape: f32[2,32], index: 9, kind: input, shape index: {}]
  %s10 = inlined_call_operand.vmem [shape: f32[2,1], index: 10, kind: input, shape index: {}]
  %s11 = inlined_call_operand.hbm [shape: f32[2,1024], index: 11, kind: output, shape index: {}]
  %s12 = sld [smem:[#allocation0]]
  $region77: #{classical_nn_forward.1} parent=0
    _
  %s14 = ssub.s32 1, %s12
  %s15 = scalar_select 0, %s14, %s12
  $region1: #{classical_nn_forward.1} parent=0
    #allocation2 [shape = 'u8[8192]{0}', space=vmem, size = 0x2000, scoped, tag = 'output window, operand 0']
    #allocation3 [shape = 's32[2]{0}', space=sflag, size = 0x8, scoped, tag = 'scoped memory for classical_nn_forward.1']
    %16 = vsyncpa [#allocation3], 0
    %s17 = scalar_lea.sflag [#allocation3], 1
    %18 = vsyncpa %s17, 0
    loop: start=0, step=1, limit=4
    $region2: #{classical_nn_forward.1} parent=1 // loop_pre_header
      _
    $region3: #{classical_nn_forward.1} parent=1 // loop_header
      %s20 = sphi 0, %s24
      %p21 = scmp.ge.s32.totalorder %s20, 4
      %s30 = sphi 0, %s32
      %s33 = sphi 0, %s30
      %s34 = sphi 0, %s33
      %s50 = sphi 0, %s34
      %s54 = sphi 0, %s54
      %s56 = sphi 0, %s54
      %s57 = sphi 0, %s56
      %s71 = sphi 0, %s57
      %s75 = sphi 0, %s75
      %s77 = sphi 0, %s75
      %s78 = sphi 0, %s77
      %s92 = sphi 0, %s78
      %s96 = sphi 0, %s96
      %s98 = sphi 0, %s96
      %s99 = sphi 0, %s98
      %s113 = sphi 0, %s99
      %s117 = sphi 0, %s117
      %s119 = sphi 0, %s117
      %s120 = sphi 0, %s119
      %s134 = sphi 0, %s120
      %s138 = sphi 0, %s138
      %s140 = sphi 0, %s138
      %s141 = sphi 0, %s140
      %s155 = sphi 0, %s141
      %s159 = sphi 0, %s159
      %s161 = sphi 0, %s159
      %s162 = sphi 0, %s161
      %s176 = sphi 0, %s162
      %s180 = sphi 0, %s180
      %s182 = sphi 0, %s180
      %s183 = sphi 0, %s182
      %s197 = sphi 0, %s183
      %s201 = sphi 0, %s201
      %s203 = sphi 0, %s201
      %s204 = sphi 0, %s203
      %s218 = sphi 0, %s204
      %s222 = sphi 0, %s222
      %s224 = sphi 0, %s222
      %s225 = sphi 0, %s224
      %s239 = sphi 0, %s225
      %s243 = sphi 0, %s243
      %s245 = sphi 0, %s243
      %s246 = sphi 0, %s245
      %s260 = sphi 0, %s246
      %s266 = sphi 0, %s268
      %s269 = sphi 0, %s266
      %s270 = sphi 0, %s269
      %s286 = sphi 0, %s270
    $region4: #{classical_nn_forward.1} parent=1 // loop_header_branch
      %23 = sbr.rel (%p21) target = $region8
    $region5: #{classical_nn_forward.1} parent=1 // loop_body
      %s25 = ssub.s32 %s20, 1
      %s26 = ssub.s32 %s20, 2
      %s27 = sadd.s32 %s20, 1
      %s28 = ssub.s32 %s20, %s27
      %p29 = scmp.eq.s32.totalorder %s28, 0
      %s31 = sadd.s32 %s30, 1
      %s32 = scalar_select %p29, %s30, %s31
      %p35 = pneg %p29
      %p36 = scmp.eq.s32.totalorder %s20, 1
      %p37 = por %p35, %p36
      %p38 = scmp.ne.s32.totalorder %s30, %s33
      %p39 = scmp.eq.s32.totalorder %s20, 0
      %p40 = por %p38, %p39
      %p41 = scmp.ne.s32.totalorder %s30, %s33
      %p42 = scmp.eq.s32.totalorder %s25, 1
      %p43 = por %p41, %p42
      %p44 = scmp.ne.s32.totalorder %s33, %s34
      %p45 = scmp.eq.s32.totalorder %s25, 0
      %p46 = por %p44, %p45
      %p47 = scmp.ne.s32.totalorder %s33, %s34
      %p48 = scmp.eq.s32.totalorder %s26, 1
      %p49 = por %p47, %p48
      %p51 = scmp.ne.s32.totalorder %s34, %s50
      %p52 = scmp.eq.s32.totalorder %s26, 0
      %p53 = por %p51, %p52
      %s55 = sadd.s32 %s54, 1
      %p58 = scmp.eq.s32.totalorder %s20, 1
      %p59 = scmp.ne.s32.totalorder %s54, %s56
      %p60 = scmp.eq.s32.totalorder %s20, 0
      %p61 = por %p59, %p60
      %p62 = scmp.ne.s32.totalorder %s54, %s56
      %p63 = scmp.eq.s32.totalorder %s25, 1
      %p64 = por %p62, %p63
      %p65 = scmp.ne.s32.totalorder %s56, %s57
      %p66 = scmp.eq.s32.totalorder %s25, 0
      %p67 = por %p65, %p66
      %p68 = scmp.ne.s32.totalorder %s56, %s57
      %p69 = scmp.eq.s32.totalorder %s26, 1
      %p70 = por %p68, %p69
      %p72 = scmp.ne.s32.totalorder %s57, %s71
      %p73 = scmp.eq.s32.totalorder %s26, 0
      %p74 = por %p72, %p73
      %s76 = sadd.s32 %s75, 1
      %p79 = scmp.eq.s32.totalorder %s20, 1
      %p80 = scmp.ne.s32.totalorder %s75, %s77
      %p81 = scmp.eq.s32.totalorder %s20, 0
      %p82 = por %p80, %p81
      %p83 = scmp.ne.s32.totalorder %s75, %s77
      %p84 = scmp.eq.s32.totalorder %s25, 1
      %p85 = por %p83, %p84
      %p86 = scmp.ne.s32.totalorder %s77, %s78
      %p87 = scmp.eq.s32.totalorder %s25, 0
      %p88 = por %p86, %p87
      %p89 = scmp.ne.s32.totalorder %s77, %s78
      %p90 = scmp.eq.s32.totalorder %s26, 1
      %p91 = por %p89, %p90
      %p93 = scmp.ne.s32.totalorder %s78, %s92
      %p94 = scmp.eq.s32.totalorder %s26, 0
      %p95 = por %p93, %p94
      %s97 = sadd.s32 %s96, 1
      %p100 = scmp.eq.s32.totalorder %s20, 1
      %p101 = scmp.ne.s32.totalorder %s96, %s98
      %p102 = scmp.eq.s32.totalorder %s20, 0
      %p103 = por %p101, %p102
      %p104 = scmp.ne.s32.totalorder %s96, %s98
      %p105 = scmp.eq.s32.totalorder %s25, 1
      %p106 = por %p104, %p105
      %p107 = scmp.ne.s32.totalorder %s98, %s99
      %p108 = scmp.eq.s32.totalorder %s25, 0
      %p109 = por %p107, %p108
      %p110 = scmp.ne.s32.totalorder %s98, %s99
      %p111 = scmp.eq.s32.totalorder %s26, 1
      %p112 = por %p110, %p111
      %p114 = scmp.ne.s32.totalorder %s99, %s113
      %p115 = scmp.eq.s32.totalorder %s26, 0
      %p116 = por %p114, %p115
      %s118 = sadd.s32 %s117, 1
      %p121 = scmp.eq.s32.totalorder %s20, 1
      %p122 = scmp.ne.s32.totalorder %s117, %s119
      %p123 = scmp.eq.s32.totalorder %s20, 0
      %p124 = por %p122, %p123
      %p125 = scmp.ne.s32.totalorder %s117, %s119
      %p126 = scmp.eq.s32.totalorder %s25, 1
      %p127 = por %p125, %p126
      %p128 = scmp.ne.s32.totalorder %s119, %s120
      %p129 = scmp.eq.s32.totalorder %s25, 0
      %p130 = por %p128, %p129
      %p131 = scmp.ne.s32.totalorder %s119, %s120
      %p132 = scmp.eq.s32.totalorder %s26, 1
      %p133 = por %p131, %p132
      %p135 = scmp.ne.s32.totalorder %s120, %s134
      %p136 = scmp.eq.s32.totalorder %s26, 0
      %p137 = por %p135, %p136
      %s139 = sadd.s32 %s138, 1
      %p142 = scmp.eq.s32.totalorder %s20, 1
      %p143 = scmp.ne.s32.totalorder %s138, %s140
      %p144 = scmp.eq.s32.totalorder %s20, 0
      %p145 = por %p143, %p144
      %p146 = scmp.ne.s32.totalorder %s138, %s140
      %p147 = scmp.eq.s32.totalorder %s25, 1
      %p148 = por %p146, %p147
      %p149 = scmp.ne.s32.totalorder %s140, %s141
      %p150 = scmp.eq.s32.totalorder %s25, 0
      %p151 = por %p149, %p150
      %p152 = scmp.ne.s32.totalorder %s140, %s141
      %p153 = scmp.eq.s32.totalorder %s26, 1
      %p154 = por %p152, %p153
      %p156 = scmp.ne.s32.totalorder %s141, %s155
      %p157 = scmp.eq.s32.totalorder %s26, 0
      %p158 = por %p156, %p157
      %s160 = sadd.s32 %s159, 1
      %p163 = scmp.eq.s32.totalorder %s20, 1
      %p164 = scmp.ne.s32.totalorder %s159, %s161
      %p165 = scmp.eq.s32.totalorder %s20, 0
      %p166 = por %p164, %p165
      %p167 = scmp.ne.s32.totalorder %s159, %s161
      %p168 = scmp.eq.s32.totalorder %s25, 1
      %p169 = por %p167, %p168
      %p170 = scmp.ne.s32.totalorder %s161, %s162
      %p171 = scmp.eq.s32.totalorder %s25, 0
      %p172 = por %p170, %p171
      %p173 = scmp.ne.s32.totalorder %s161, %s162
      %p174 = scmp.eq.s32.totalorder %s26, 1
      %p175 = por %p173, %p174
      %p177 = scmp.ne.s32.totalorder %s162, %s176
      %p178 = scmp.eq.s32.totalorder %s26, 0
      %p179 = por %p177, %p178
      %s181 = sadd.s32 %s180, 1
      %p184 = scmp.eq.s32.totalorder %s20, 1
      %p185 = scmp.ne.s32.totalorder %s180, %s182
      %p186 = scmp.eq.s32.totalorder %s20, 0
      %p187 = por %p185, %p186
      %p188 = scmp.ne.s32.totalorder %s180, %s182
      %p189 = scmp.eq.s32.totalorder %s25, 1
      %p190 = por %p188, %p189
      %p191 = scmp.ne.s32.totalorder %s182, %s183
      %p192 = scmp.eq.s32.totalorder %s25, 0
      %p193 = por %p191, %p192
      %p194 = scmp.ne.s32.totalorder %s182, %s183
      %p195 = scmp.eq.s32.totalorder %s26, 1
      %p196 = por %p194, %p195
      %p198 = scmp.ne.s32.totalorder %s183, %s197
      %p199 = scmp.eq.s32.totalorder %s26, 0
      %p200 = por %p198, %p199
      %s202 = sadd.s32 %s201, 1
      %p205 = scmp.eq.s32.totalorder %s20, 1
      %p206 = scmp.ne.s32.totalorder %s201, %s203
      %p207 = scmp.eq.s32.totalorder %s20, 0
      %p208 = por %p206, %p207
      %p209 = scmp.ne.s32.totalorder %s201, %s203
      %p210 = scmp.eq.s32.totalorder %s25, 1
      %p211 = por %p209, %p210
      %p212 = scmp.ne.s32.totalorder %s203, %s204
      %p213 = scmp.eq.s32.totalorder %s25, 0
      %p214 = por %p212, %p213
      %p215 = scmp.ne.s32.totalorder %s203, %s204
      %p216 = scmp.eq.s32.totalorder %s26, 1
      %p217 = por %p215, %p216
      %p219 = scmp.ne.s32.totalorder %s204, %s218
      %p220 = scmp.eq.s32.totalorder %s26, 0
      %p221 = por %p219, %p220
      %s223 = sadd.s32 %s222, 1
      %p226 = scmp.eq.s32.totalorder %s20, 1
      %p227 = scmp.ne.s32.totalorder %s222, %s224
      %p228 = scmp.eq.s32.totalorder %s20, 0
      %p229 = por %p227, %p228
      %p230 = scmp.ne.s32.totalorder %s222, %s224
      %p231 = scmp.eq.s32.totalorder %s25, 1
      %p232 = por %p230, %p231
      %p233 = scmp.ne.s32.totalorder %s224, %s225
      %p234 = scmp.eq.s32.totalorder %s25, 0
      %p235 = por %p233, %p234
      %p236 = scmp.ne.s32.totalorder %s224, %s225
      %p237 = scmp.eq.s32.totalorder %s26, 1
      %p238 = por %p236, %p237
      %p240 = scmp.ne.s32.totalorder %s225, %s239
      %p241 = scmp.eq.s32.totalorder %s26, 0
      %p242 = por %p240, %p241
      %s244 = sadd.s32 %s243, 1
      %p247 = scmp.eq.s32.totalorder %s20, 1
      %p248 = scmp.ne.s32.totalorder %s243, %s245
      %p249 = scmp.eq.s32.totalorder %s20, 0
      %p250 = por %p248, %p249
      %p251 = scmp.ne.s32.totalorder %s243, %s245
      %p252 = scmp.eq.s32.totalorder %s25, 1
      %p253 = por %p251, %p252
      %p254 = scmp.ne.s32.totalorder %s245, %s246
      %p255 = scmp.eq.s32.totalorder %s25, 0
      %p256 = por %p254, %p255
      %p257 = scmp.ne.s32.totalorder %s245, %s246
      %p258 = scmp.eq.s32.totalorder %s26, 1
      %p259 = por %p257, %p258
      %p261 = scmp.ne.s32.totalorder %s246, %s260
      %p262 = scmp.eq.s32.totalorder %s26, 0
      %p263 = por %p261, %p262
      %s264 = ssub.s32 %s20, %s27
      %p265 = scmp.eq.s32.totalorder %s264, 0
      %s267 = sadd.s32 %s266, 1
      %s268 = scalar_select %p265, %s266, %s267
      %p271 = pneg %p265
      %p272 = scmp.eq.s32.totalorder %s20, 1
      %p273 = por %p271, %p272
      %p274 = scmp.ne.s32.totalorder %s266, %s269
      %p275 = scmp.eq.s32.totalorder %s20, 0
      %p276 = por %p274, %p275
      %p277 = scmp.ne.s32.totalorder %s266, %s269
      %p278 = scmp.eq.s32.totalorder %s25, 1
      %p279 = por %p277, %p278
      %p280 = scmp.ne.s32.totalorder %s269, %s270
      %p281 = scmp.eq.s32.totalorder %s25, 0
      %p282 = por %p280, %p281
      %p283 = scmp.ne.s32.totalorder %s269, %s270
      %p284 = scmp.eq.s32.totalorder %s26, 1
      %p285 = por %p283, %p284
      %p287 = scmp.ne.s32.totalorder %s270, %s286
      %p288 = scmp.eq.s32.totalorder %s26, 0
      %p289 = por %p287, %p288
      %p290 = scmp.le.s32.totalorder 1, %s20
      %p291 = scmp.lt.s32.totalorder %s20, 3
      %p292 = pnand %p290, %p291
      %p293 = pneg %p292
      // Predicated region
      $region9: #{classical_nn_forward.1} parent=5 // pred_check
        _
      $region10: #{classical_nn_forward.1} parent=5 // pred_check_branch
        %295 = sbr.rel (%p292) target = $region12
      $region11: #{classical_nn_forward.1} parent=5 // pred_region
        %s296 = ssub.s32 %s20, 1
        // Predicated region
        $region13: #{classical_nn_forward.1} parent=11 // pred_check
          %p297 = pneg %p67
        $region14: #{classical_nn_forward.1} parent=11 // pred_check_branch
          %299 = sbr.rel (%p297) target = $region16
        $region15: #{classical_nn_forward.1} parent=11 // pred_region
          _
        $region16: #{classical_nn_forward.1} parent=11 // pred_fallthru
          _
        // Predicated region
        $region17: #{classical_nn_forward.1} parent=11 // pred_check
          %p300 = pneg %p88
        $region18: #{classical_nn_forward.1} parent=11 // pred_check_branch
          %302 = sbr.rel (%p300) target = $region20
        $region19: #{classical_nn_forward.1} parent=11 // pred_region
          _
        $region20: #{classical_nn_forward.1} parent=11 // pred_fallthru
          _
        // Predicated region
        $region21: #{classical_nn_forward.1} parent=11 // pred_check
          %p303 = pneg %p109
        $region22: #{classical_nn_forward.1} parent=11 // pred_check_branch
          %305 = sbr.rel (%p303) target = $region24
        $region23: #{classical_nn_forward.1} parent=11 // pred_region
          _
        $region24: #{classical_nn_forward.1} parent=11 // pred_fallthru
          _
        // Predicated region
        $region25: #{classical_nn_forward.1} parent=11 // pred_check
          %p306 = pneg %p130
        $region26: #{classical_nn_forward.1} parent=11 // pred_check_branch
          %308 = sbr.rel (%p306) target = $region28
        $region27: #{classical_nn_forward.1} parent=11 // pred_region
          _
        $region28: #{classical_nn_forward.1} parent=11 // pred_fallthru
          _
        // Predicated region
        $region29: #{classical_nn_forward.1} parent=11 // pred_check
          %p309 = pneg %p151
        $region30: #{classical_nn_forward.1} parent=11 // pred_check_branch
          %311 = sbr.rel (%p309) target = $region32
        $region31: #{classical_nn_forward.1} parent=11 // pred_region
          _
        $region32: #{classical_nn_forward.1} parent=11 // pred_fallthru
          _
        // Predicated region
        $region33: #{classical_nn_forward.1} parent=11 // pred_check
          %p312 = pneg %p172
        $region34: #{classical_nn_forward.1} parent=11 // pred_check_branch
          %314 = sbr.rel (%p312) target = $region36
        $region35: #{classical_nn_forward.1} parent=11 // pred_region
          _
        $region36: #{classical_nn_forward.1} parent=11 // pred_fallthru
          _
        // Predicated region
        $region37: #{classical_nn_forward.1} parent=11 // pred_check
          %p315 = pneg %p193
        $region38: #{classical_nn_forward.1} parent=11 // pred_check_branch
          %317 = sbr.rel (%p315) target = $region40
        $region39: #{classical_nn_forward.1} parent=11 // pred_region
          _
        $region40: #{classical_nn_forward.1} parent=11 // pred_fallthru
          _
        // Predicated region
        $region41: #{classical_nn_forward.1} parent=11 // pred_check
          %p318 = pneg %p214
        $region42: #{classical_nn_forward.1} parent=11 // pred_check_branch
          %320 = sbr.rel (%p318) target = $region44
        $region43: #{classical_nn_forward.1} parent=11 // pred_region
          _
        $region44: #{classical_nn_forward.1} parent=11 // pred_fallthru
          _
        // Predicated region
        $region45: #{classical_nn_forward.1} parent=11 // pred_check
          %p321 = pneg %p235
        $region46: #{classical_nn_forward.1} parent=11 // pred_check_branch
          %323 = sbr.rel (%p321) target = $region48
        $region47: #{classical_nn_forward.1} parent=11 // pred_region
          _
        $region48: #{classical_nn_forward.1} parent=11 // pred_fallthru
          _
        // Predicated region
        $region49: #{classical_nn_forward.1} parent=11 // pred_check
          %p324 = pneg %p256
        $region50: #{classical_nn_forward.1} parent=11 // pred_check_branch
          %326 = sbr.rel (%p324) target = $region52
        $region51: #{classical_nn_forward.1} parent=11 // pred_region
          _
        $region52: #{classical_nn_forward.1} parent=11 // pred_fallthru
          _
      $region12: #{classical_nn_forward.1} parent=5 // pred_fallthru
        _
      %p327 = scmp.lt.s32.totalorder %s20, 2
      // Predicated region
      $region53: #{classical_nn_forward.1} parent=5 // pred_check
        %p328 = pneg %p327
      $region54: #{classical_nn_forward.1} parent=5 // pred_check_branch
        %330 = sbr.rel (%p328) target = $region56
      $region55: #{classical_nn_forward.1} parent=5 // pred_region
        // Predicated region
        $region57: #{classical_nn_forward.1} parent=55 // pred_check
          %p331 = pneg %p40
        $region58: #{classical_nn_forward.1} parent=55 // pred_check_branch
          %333 = sbr.rel (%p331) target = $region60
        $region59: #{classical_nn_forward.1} parent=55 // pred_region
          %s334 = smul.u32 4, %s20
          %p335 = scmp.lt.s32.totalorder %s334, 7
          %s336 = scalar_select %p335, %s334, 7
          %s337 = smul.addr %s336, 4
          %s338 = scalar_lea.vmem %s0, %s337
          %s339 = smul.u32 4, %s20
        $region60: #{classical_nn_forward.1} parent=55 // pred_fallthru
          _
      $region56: #{classical_nn_forward.1} parent=5 // pred_fallthru
        _
      %p340 = scmp.le.s32.totalorder 1, %s20
      %p341 = scmp.lt.s32.totalorder %s20, 3
      %p342 = pnand %p340, %p341
      %p343 = pneg %p342
      // Predicated region
      $region61: #{classical_nn_forward.1} parent=5 // pred_check
        _
      $region62: #{classical_nn_forward.1} parent=5 // pred_check_branch
        %345 = sbr.rel (%p342) target = $region64
      $region63: #{classical_nn_forward.1} parent=5 // pred_region
        %s346 = ssub.s32 %s20, 1
        %s347 = smul.u32 4, %s25
        %p348 = scmp.lt.s32.totalorder %s347, 7
        %s349 = scalar_select %p348, %s347, 7
        %s350 = smul.addr %s349, 4
        %s351 = scalar_lea.vmem %s0, %s350
        %p352 = pneg %p46
        %p353 = pneg %p43
        %p354 = pneg %p67
        %p355 = pneg %p64
        %p356 = pneg %p88
        %p357 = pneg %p85
        %p358 = pneg %p109
        %p359 = pneg %p106
        %p360 = pneg %p130
        %p361 = pneg %p127
        %p362 = pneg %p151
        %p363 = pneg %p148
        %p364 = pneg %p172
        %p365 = pneg %p169
        %p366 = pneg %p193
        %p367 = pneg %p190
        %p368 = pneg %p214
        %p369 = pneg %p211
        %p370 = pneg %p235
        %p371 = pneg %p232
        %p372 = pneg %p256
        %p373 = pneg %p253
        %p374 = pneg %p282
        %p375 = pneg %p279
        %s376 = sand.u32 %s269, 1
        %s377 = scalar_lea.sflag [#allocation3], %s376
        %s378 = sand.u32 %s269, 1
        %s379 = smul.addr %s378, 8
        %s380 = scalar_lea.vmem [#allocation2], %s379
        %s381 = smul.u32 4, %s25
        %p382 = scmp.lt.s32.totalorder %s381, 7
        %s383 = scalar_select %p382, %s381, 7
        %s384 = smul.addr %s383, 4
        %s385 = scalar_lea.vmem %s0, %s384
        %s386 = smul.u32 4, %s25
        %s387 = smul.u32 4, %s25
        %v388 = vld [vmem:[%s385] sm:$0xff]
        %v389 = vld [vmem:[%s385 + $0x8] sm:$0xff]
        %v390 = vld [vmem:[%s1] sm:$0xff]
        %v391 = vld [vmem:[%s1 + $0x8] sm:$0xff]
        %v392 = vld [vmem:[%s1 + $0x10] sm:$0xff]
        %v393 = vld [vmem:[%s1 + $0x18] sm:$0xff]
        %v394 = vld [vmem:[%s2] sm:$0xff]
        %v395 = vld [vmem:[%s2 + $0x8] sm:$0xff]
        %v396 = vld [vmem:[%s2 + $0x10] sm:$0xff]
        %v397 = vld [vmem:[%s2 + $0x18] sm:$0xff]
        %399 = vset.pattern.permute.xlu0 0
        %400 = vperm.xlu0 %399, %v394
        %v401 = vpop.permute.xlu0 %400
        %404 = vset.pattern.permute.xlu0 0
        %405 = vperm.xlu0 %404, %v395
        %v406 = vpop.permute.xlu0 %405
        %409 = vset.pattern.permute.xlu0 0
        %410 = vperm.xlu0 %409, %v396
        %v411 = vpop.permute.xlu0 %410
        %414 = vset.pattern.permute.xlu0 0
        %415 = vperm.xlu0 %414, %v397
        %v416 = vpop.permute.xlu0 %415
        %v420 = vcombine.high %v388, %v388
        %v421 = vcombine.high %v389, %v389
        %vm422 = vcmask 31744
        %v424 = vsel %vm422, %v390, 0
        %v427 = vsel %vm422, %v391, 0
        %v430 = vsel %vm422, %v392, 0
        %v433 = vsel %vm422, %v393, 0
        %vm435 = vcmask 1043456
        %v436 = vsel %vm435, %v388, 0
        %v438 = vsel %vm435, %v420, 0
        %v440 = vsel %vm435, %v389, 0
        %v442 = vsel %vm435, %v421, 0
        %444 = vmatprep.subr.mxu0 %v438
        %445 = vmatpush1.msra.mxu0 %v436
        %446 = vmatprep.subr.mxu0 0.0
        %447 = vmatpush1.msra.mxu0 0.0
        %448 = vmatprep.subr.mxu0 0.0
        %449 = vmatpush1.msra.mxu0 0.0
        %450 = vmatprep.subr.mxu0 0.0
        %451 = vmatpush1.msra.mxu0 0.0
        %452 = vmatprep.subr.mxu0 0.0
        %453 = vmatpush1.msra.mxu0 0.0
        %454 = vmatprep.subr.mxu0 0.0
        %455 = vmatpush1.msra.mxu0 0.0
        %456 = vmatprep.subr.mxu0 0.0
        %457 = vmatpush1.msra.mxu0 0.0
        %458 = vmatprep.subr.mxu0 0.0
        %459 = vmatpush1.msra.mxu0 0.0
        %460 = vmatprep.subr.mxu0 0.0
        %461 = vmatpush1.msra.mxu0 0.0
        %462 = vmatprep.subr.mxu0 0.0
        %463 = vmatpush1.msra.mxu0 0.0
        %464 = vmatprep.subr.mxu0 0.0
        %465 = vmatpush1.msra.mxu0 0.0
        %466 = vmatprep.subr.mxu0 0.0
        %467 = vmatpush1.msra.mxu0 0.0
        %468 = vmatprep.subr.mxu0 0.0
        %469 = vmatpush1.msra.mxu0 0.0
        %470 = vmatprep.subr.mxu0 0.0
        %471 = vmatpush1.msra.mxu0 0.0
        %472 = vmatprep.subr.mxu0 0.0
        %473 = vmatpush1.msra.mxu0 0.0
        %474 = vmatprep.subr.mxu0 0.0
        %475 = vmatpush1.msra.mxu0 0.0
        %476 = vmatprep.subr.mxu0 0.0
        %477 = vmatpush1.msra.mxu0 0.0
        %478 = vmatprep.subr.mxu0 0.0
        %479 = vmatpush1.msra.mxu0 0.0
        %480 = vmatprep.subr.mxu0 0.0
        %481 = vmatpush1.msra.mxu0 0.0
        %482 = vmatprep.subr.mxu0 0.0
        %483 = vmatpush1.msra.mxu0 0.0
        %484 = vmatprep.subr.mxu0 0.0
        %485 = vmatpush1.msra.mxu0 0.0
        %486 = vmatprep.subr.mxu0 0.0
        %487 = vmatpush1.msra.mxu0 0.0
        %488 = vmatprep.subr.mxu0 0.0
        %489 = vmatpush1.msra.mxu0 0.0
        %490 = vmatprep.subr.mxu0 0.0
        %491 = vmatpush1.msra.mxu0 0.0
        %492 = vmatprep.subr.mxu0 0.0
        %493 = vmatpush1.msra.mxu0 0.0
        %494 = vmatprep.subr.mxu0 0.0
        %495 = vmatpush1.msra.mxu0 0.0
        %496 = vmatprep.subr.mxu0 0.0
        %497 = vmatpush1.msra.mxu0 0.0
        %498 = vmatprep.subr.mxu0 0.0
        %499 = vmatpush1.msra.mxu0 0.0
        %500 = vmatprep.subr.mxu0 0.0
        %501 = vmatpush1.msra.mxu0 0.0
        %502 = vmatprep.subr.mxu0 0.0
        %503 = vmatpush1.msra.mxu0 0.0
        %504 = vmatprep.subr.mxu0 0.0
        %505 = vmatpush1.msra.mxu0 0.0
        %506 = vmatprep.subr.mxu0 0.0
        %507 = vmatpush1.msra.mxu0 0.0
        %508 = vmatprep.mubr.f32.mxu0 0.0
        %509 = vmatmul.mubr.f32.gmra.mrb[0].mxu0 %v424
        %v510 = vpop.f32.mrb[0].mxu0
        %v511 = vadd.f32 %v401, %v510
        %v512 = vpop.f32.mrb[0].mxu0
        %v513 = vadd.f32 %v401, %v512
        %514 = vmatprep.mubr.f32.mxu0 0.0
        %515 = vmatmul.mubr.f32.gmra.mrb[0].mxu0 %v427
        %v516 = vpop.f32.mrb[0].mxu0
        %v517 = vadd.f32 %v406, %v516
        %v518 = vpop.f32.mrb[0].mxu0
        %v519 = vadd.f32 %v406, %v518
        %520 = vmatprep.mubr.f32.mxu0 0.0
        %521 = vmatmul.mubr.f32.gmra.mrb[0].mxu0 %v430
        %v522 = vpop.f32.mrb[0].mxu0
        %v523 = vadd.f32 %v411, %v522
        %v524 = vpop.f32.mrb[0].mxu0
        %v525 = vadd.f32 %v411, %v524
        %526 = vmatprep.mubr.f32.mxu0 0.0
        %527 = vmatmul.mubr.f32.gmra.mrb[0].mxu0 %v433
        %v528 = vpop.f32.mrb[0].mxu0
        %v529 = vadd.f32 %v416, %v528
        %v530 = vpop.f32.mrb[0].mxu0
        %v531 = vadd.f32 %v416, %v530
        %532 = vdwg.mxu0
        %533 = vmatprep.subr.mxu0 %v442
        %534 = vmatpush1.msra.mxu0 %v440
        %535 = vmatprep.subr.mxu0 0.0
        %536 = vmatpush1.msra.mxu0 0.0
        %537 = vmatprep.subr.mxu0 0.0
        %538 = vmatpush1.msra.mxu0 0.0
        %539 = vmatprep.subr.mxu0 0.0
        %540 = vmatpush1.msra.mxu0 0.0
        %541 = vmatprep.subr.mxu0 0.0
        %542 = vmatpush1.msra.mxu0 0.0
        %543 = vmatprep.subr.mxu0 0.0
        %544 = vmatpush1.msra.mxu0 0.0
        %545 = vmatprep.subr.mxu0 0.0
        %546 = vmatpush1.msra.mxu0 0.0
        %547 = vmatprep.subr.mxu0 0.0
        %548 = vmatpush1.msra.mxu0 0.0
        %549 = vmatprep.subr.mxu0 0.0
        %550 = vmatpush1.msra.mxu0 0.0
        %551 = vmatprep.subr.mxu0 0.0
        %552 = vmatpush1.msra.mxu0 0.0
        %553 = vmatprep.subr.mxu0 0.0
        %554 = vmatpush1.msra.mxu0 0.0
        %555 = vmatprep.subr.mxu0 0.0
        %556 = vmatpush1.msra.mxu0 0.0
        %557 = vmatprep.subr.mxu0 0.0
        %558 = vmatpush1.msra.mxu0 0.0
        %559 = vmatprep.subr.mxu0 0.0
        %560 = vmatpush1.msra.mxu0 0.0
        %561 = vmatprep.subr.mxu0 0.0
        %562 = vmatpush1.msra.mxu0 0.0
        %563 = vmatprep.subr.mxu0 0.0
        %564 = vmatpush1.msra.mxu0 0.0
        %565 = vmatprep.subr.mxu0 0.0
        %566 = vmatpush1.msra.mxu0 0.0
        %567 = vmatprep.subr.mxu0 0.0
        %568 = vmatpush1.msra.mxu0 0.0
        %569 = vmatprep.subr.mxu0 0.0
        %570 = vmatpush1.msra.mxu0 0.0
        %571 = vmatprep.subr.mxu0 0.0
        %572 = vmatpush1.msra.mxu0 0.0
        %573 = vmatprep.subr.mxu0 0.0
        %574 = vmatpush1.msra.mxu0 0.0
        %575 = vmatprep.subr.mxu0 0.0
        %576 = vmatpush1.msra.mxu0 0.0
        %577 = vmatprep.subr.mxu0 0.0
        %578 = vmatpush1.msra.mxu0 0.0
        %579 = vmatprep.subr.mxu0 0.0
        %580 = vmatpush1.msra.mxu0 0.0
        %581 = vmatprep.subr.mxu0 0.0
        %582 = vmatpush1.msra.mxu0 0.0
        %583 = vmatprep.subr.mxu0 0.0
        %584 = vmatpush1.msra.mxu0 0.0
        %585 = vmatprep.subr.mxu0 0.0
        %586 = vmatpush1.msra.mxu0 0.0
        %587 = vmatprep.subr.mxu0 0.0
        %588 = vmatpush1.msra.mxu0 0.0
        %589 = vmatprep.subr.mxu0 0.0
        %590 = vmatpush1.msra.mxu0 0.0
        %591 = vmatprep.subr.mxu0 0.0
        %592 = vmatpush1.msra.mxu0 0.0
        %593 = vmatprep.subr.mxu0 0.0
        %594 = vmatpush1.msra.mxu0 0.0
        %595 = vmatprep.subr.mxu0 0.0
        %596 = vmatpush1.msra.mxu0 0.0
        %597 = vmatprep.mubr.f32.mxu0 0.0
        %598 = vmatmul.mubr.f32.gmra.mrb[0].mxu0 %v424
        %v599 = vpop.f32.mrb[0].mxu0
        %v600 = vadd.f32 %v401, %v599
        %v601 = vpop.f32.mrb[0].mxu0
        %v602 = vadd.f32 %v401, %v601
        %603 = vmatprep.mubr.f32.mxu0 0.0
        %604 = vmatmul.mubr.f32.gmra.mrb[0].mxu0 %v427
        %v605 = vpop.f32.mrb[0].mxu0
        %v606 = vadd.f32 %v406, %v605
        %v607 = vpop.f32.mrb[0].mxu0
        %v608 = vadd.f32 %v406, %v607
        %609 = vmatprep.mubr.f32.mxu0 0.0
        %610 = vmatmul.mubr.f32.gmra.mrb[0].mxu0 %v430
        %v611 = vpop.f32.mrb[0].mxu0
        %v612 = vadd.f32 %v411, %v611
        %v613 = vpop.f32.mrb[0].mxu0
        %v614 = vadd.f32 %v411, %v613
        %615 = vmatprep.mubr.f32.mxu0 0.0
        %616 = vmatmul.mubr.f32.gmra.mrb[0].mxu0 %v433
        %v617 = vpop.f32.mrb[0].mxu0
        %v618 = vadd.f32 %v416, %v617
        %v619 = vpop.f32.mrb[0].mxu0
        %v620 = vadd.f32 %v416, %v619
        %621 = vdwg.mxu0
        %v622 = vmax.f32 %v511, 0.0
        %v623 = vmax.f32 %v513, 0.0
        %v624 = vmax.f32 %v600, 0.0
        %v625 = vmax.f32 %v602, 0.0
        %v626 = vmax.f32 %v517, 0.0
        %v627 = vmax.f32 %v519, 0.0
        %v628 = vmax.f32 %v606, 0.0
        %v629 = vmax.f32 %v608, 0.0
        %v630 = vmax.f32 %v523, 0.0
        %v631 = vmax.f32 %v525, 0.0
        %v632 = vmax.f32 %v612, 0.0
        %v633 = vmax.f32 %v614, 0.0
        %v634 = vmax.f32 %v529, 0.0
        %v635 = vmax.f32 %v531, 0.0
        %v636 = vmax.f32 %v618, 0.0
        %v637 = vmax.f32 %v620, 0.0
        %v638 = vand.u32 2147483647, %v511
        %v639 = vand.u32 2147483647, %v513
        %v640 = vand.u32 2147483647, %v600
        %v641 = vand.u32 2147483647, %v602
        %v642 = vand.u32 2147483647, %v517
        %v643 = vand.u32 2147483647, %v519
        %v644 = vand.u32 2147483647, %v606
        %v645 = vand.u32 2147483647, %v608
        %v646 = vand.u32 2147483647, %v523
        %v647 = vand.u32 2147483647, %v525
        %v648 = vand.u32 2147483647, %v612
        %v649 = vand.u32 2147483647, %v614
        %v650 = vand.u32 2147483647, %v529
        %v651 = vand.u32 2147483647, %v531
        %v652 = vand.u32 2147483647, %v618
        %v653 = vand.u32 2147483647, %v620
        %v654 = vsub.f32 0.0, %v638
        %v655 = vsub.f32 0.0, %v639
        %v656 = vsub.f32 0.0, %v640
        %v657 = vsub.f32 0.0, %v641
        %v658 = vsub.f32 0.0, %v642
        %v659 = vsub.f32 0.0, %v643
        %v660 = vsub.f32 0.0, %v644
        %v661 = vsub.f32 0.0, %v645
        %v662 = vsub.f32 0.0, %v646
        %v663 = vsub.f32 0.0, %v647
        %v664 = vsub.f32 0.0, %v648
        %v665 = vsub.f32 0.0, %v649
        %v666 = vsub.f32 0.0, %v650
        %v667 = vsub.f32 0.0, %v651
        %v668 = vsub.f32 0.0, %v652
        %v669 = vsub.f32 0.0, %v653
        %v670 = vmul.f32 %v654, 1.442695
        %v671 = vpow.pop %v670
        %v672 = vmul.f32 %v655, 1.442695
        %v673 = vpow.pop %v672
        %v674 = vmul.f32 %v656, 1.442695
        %v675 = vpow.pop %v674
        %v676 = vmul.f32 %v657, 1.442695
        %v677 = vpow.pop %v676
        %v678 = vmul.f32 %v658, 1.442695
        %v679 = vpow.pop %v678
        %v680 = vmul.f32 %v659, 1.442695
        %v681 = vpow.pop %v680
        %v682 = vmul.f32 %v660, 1.442695
        %v683 = vpow.pop %v682
        %v684 = vmul.f32 %v661, 1.442695
        %v685 = vpow.pop %v684
        %v686 = vmul.f32 %v662, 1.442695
        %v687 = vpow.pop %v686
        %v688 = vmul.f32 %v663, 1.442695
        %v689 = vpow.pop %v688
        %v690 = vmul.f32 %v664, 1.442695
        %v691 = vpow.pop %v690
        %v692 = vmul.f32 %v665, 1.442695
        %v693 = vpow.pop %v692
        %v694 = vmul.f32 %v666, 1.442695
        %v695 = vpow.pop %v694
        %v696 = vmul.f32 %v667, 1.442695
        %v697 = vpow.pop %v696
        %v698 = vmul.f32 %v668, 1.442695
        %v699 = vpow.pop %v698
        %v700 = vmul.f32 %v669, 1.442695
        %v701 = vpow.pop %v700
        %v702 = vadd.f32 %v671, 1.0
        %v703 = vlog2.pop %v702
        %v704 = vmul.f32 %v703, 0.6931472
        %v705 = vmul.f32 -0.5, %v671
        %v706 = vadd.f32 %v705, 1.0
        %v707 = vmul.f32 %v706, %v671
        %v708 = vand.u32 2147483647, %v671
        %vm709 = vcmp.lt.f32.partialorder %v708, 0.0004427343
        %v710 = vsel %vm709, %v707, %v704
        %v711 = vadd.f32 %v673, 1.0
        %v712 = vlog2.pop %v711
        %v713 = vmul.f32 %v712, 0.6931472
        %v714 = vmul.f32 -0.5, %v673
        %v715 = vadd.f32 %v714, 1.0
        %v716 = vmul.f32 %v715, %v673
        %v717 = vand.u32 2147483647, %v673
        %vm718 = vcmp.lt.f32.partialorder %v717, 0.0004427343
        %v719 = vsel %vm718, %v716, %v713
        %v720 = vadd.f32 %v675, 1.0
        %v721 = vlog2.pop %v720
        %v722 = vmul.f32 %v721, 0.6931472
        %v723 = vmul.f32 -0.5, %v675
        %v724 = vadd.f32 %v723, 1.0
        %v725 = vmul.f32 %v724, %v675
        %v726 = vand.u32 2147483647, %v675
        %vm727 = vcmp.lt.f32.partialorder %v726, 0.0004427343
        %v728 = vsel %vm727, %v725, %v722
        %v729 = vadd.f32 %v677, 1.0
        %v730 = vlog2.pop %v729
        %v731 = vmul.f32 %v730, 0.6931472
        %v732 = vmul.f32 -0.5, %v677
        %v733 = vadd.f32 %v732, 1.0
        %v734 = vmul.f32 %v733, %v677
        %v735 = vand.u32 2147483647, %v677
        %vm736 = vcmp.lt.f32.partialorder %v735, 0.0004427343
        %v737 = vsel %vm736, %v734, %v731
        %v738 = vadd.f32 %v679, 1.0
        %v739 = vlog2.pop %v738
        %v740 = vmul.f32 %v739, 0.6931472
        %v741 = vmul.f32 -0.5, %v679
        %v742 = vadd.f32 %v741, 1.0
        %v743 = vmul.f32 %v742, %v679
        %v744 = vand.u32 2147483647, %v679
        %vm745 = vcmp.lt.f32.partialorder %v744, 0.0004427343
        %v746 = vsel %vm745, %v743, %v740
        %v747 = vadd.f32 %v681, 1.0
        %v748 = vlog2.pop %v747
        %v749 = vmul.f32 %v748, 0.6931472
        %v750 = vmul.f32 -0.5, %v681
        %v751 = vadd.f32 %v750, 1.0
        %v752 = vmul.f32 %v751, %v681
        %v753 = vand.u32 2147483647, %v681
        %vm754 = vcmp.lt.f32.partialorder %v753, 0.0004427343
        %v755 = vsel %vm754, %v752, %v749
        %v756 = vadd.f32 %v683, 1.0
        %v757 = vlog2.pop %v756
        %v758 = vmul.f32 %v757, 0.6931472
        %v759 = vmul.f32 -0.5, %v683
        %v760 = vadd.f32 %v759, 1.0
        %v761 = vmul.f32 %v760, %v683
        %v762 = vand.u32 2147483647, %v683
        %vm763 = vcmp.lt.f32.partialorder %v762, 0.0004427343
        %v764 = vsel %vm763, %v761, %v758
        %v765 = vadd.f32 %v685, 1.0
        %v766 = vlog2.pop %v765
        %v767 = vmul.f32 %v766, 0.6931472
        %v768 = vmul.f32 -0.5, %v685
        %v769 = vadd.f32 %v768, 1.0
        %v770 = vmul.f32 %v769, %v685
        %v771 = vand.u32 2147483647, %v685
        %vm772 = vcmp.lt.f32.partialorder %v771, 0.0004427343
        %v773 = vsel %vm772, %v770, %v767
        %v774 = vadd.f32 %v687, 1.0
        %v775 = vlog2.pop %v774
        %v776 = vmul.f32 %v775, 0.6931472
        %v777 = vmul.f32 -0.5, %v687
        %v778 = vadd.f32 %v777, 1.0
        %v779 = vmul.f32 %v778, %v687
        %v780 = vand.u32 2147483647, %v687
        %vm781 = vcmp.lt.f32.partialorder %v780, 0.0004427343
        %v782 = vsel %vm781, %v779, %v776
        %v783 = vadd.f32 %v689, 1.0
        %v784 = vlog2.pop %v783
        %v785 = vmul.f32 %v784, 0.6931472
        %v786 = vmul.f32 -0.5, %v689
        %v787 = vadd.f32 %v786, 1.0
        %v788 = vmul.f32 %v787, %v689
        %v789 = vand.u32 2147483647, %v689
        %vm790 = vcmp.lt.f32.partialorder %v789, 0.0004427343
        %v791 = vsel %vm790, %v788, %v785
        %v792 = vadd.f32 %v691, 1.0
        %v793 = vlog2.pop %v792
        %v794 = vmul.f32 %v793, 0.6931472
        %v795 = vmul.f32 -0.5, %v691
        %v796 = vadd.f32 %v795, 1.0
        %v797 = vmul.f32 %v796, %v691
        %v798 = vand.u32 2147483647, %v691
        %vm799 = vcmp.lt.f32.partialorder %v798, 0.0004427343
        %v800 = vsel %vm799, %v797, %v794
        %v801 = vadd.f32 %v693, 1.0
        %v802 = vlog2.pop %v801
        %v803 = vmul.f32 %v802, 0.6931472
        %v804 = vmul.f32 -0.5, %v693
        %v805 = vadd.f32 %v804, 1.0
        %v806 = vmul.f32 %v805, %v693
        %v807 = vand.u32 2147483647, %v693
        %vm808 = vcmp.lt.f32.partialorder %v807, 0.0004427343
        %v809 = vsel %vm808, %v806, %v803
        %v810 = vadd.f32 %v695, 1.0
        %v811 = vlog2.pop %v810
        %v812 = vmul.f32 %v811, 0.6931472
        %v813 = vmul.f32 -0.5, %v695
        %v814 = vadd.f32 %v813, 1.0
        %v815 = vmul.f32 %v814, %v695
        %v816 = vand.u32 2147483647, %v695
        %vm817 = vcmp.lt.f32.partialorder %v816, 0.0004427343
        %v818 = vsel %vm817, %v815, %v812
        %v819 = vadd.f32 %v697, 1.0
        %v820 = vlog2.pop %v819
        %v821 = vmul.f32 %v820, 0.6931472
        %v822 = vmul.f32 -0.5, %v697
        %v823 = vadd.f32 %v822, 1.0
        %v824 = vmul.f32 %v823, %v697
        %v825 = vand.u32 2147483647, %v697
        %vm826 = vcmp.lt.f32.partialorder %v825, 0.0004427343
        %v827 = vsel %vm826, %v824, %v821
        %v828 = vadd.f32 %v699, 1.0
        %v829 = vlog2.pop %v828
        %v830 = vmul.f32 %v829, 0.6931472
        %v831 = vmul.f32 -0.5, %v699
        %v832 = vadd.f32 %v831, 1.0
        %v833 = vmul.f32 %v832, %v699
        %v834 = vand.u32 2147483647, %v699
        %vm835 = vcmp.lt.f32.partialorder %v834, 0.0004427343
        %v836 = vsel %vm835, %v833, %v830
        %v837 = vadd.f32 %v701, 1.0
        %v838 = vlog2.pop %v837
        %v839 = vmul.f32 %v838, 0.6931472
        %v840 = vmul.f32 -0.5, %v701
        %v841 = vadd.f32 %v840, 1.0
        %v842 = vmul.f32 %v841, %v701
        %v843 = vand.u32 2147483647, %v701
        %vm844 = vcmp.lt.f32.partialorder %v843, 0.0004427343
        %v845 = vsel %vm844, %v842, %v839
        %v846 = vadd.f32 %v622, %v710
        %v847 = vadd.f32 %v623, %v719
        %v848 = vadd.f32 %v624, %v728
        %v849 = vadd.f32 %v625, %v737
        %v850 = vadd.f32 %v626, %v746
        %v851 = vadd.f32 %v627, %v755
        %v852 = vadd.f32 %v628, %v764
        %v853 = vadd.f32 %v629, %v773
        %v854 = vadd.f32 %v630, %v782
        %v855 = vadd.f32 %v631, %v791
        %v856 = vadd.f32 %v632, %v800
        %v857 = vadd.f32 %v633, %v809
        %v858 = vadd.f32 %v634, %v818
        %v859 = vadd.f32 %v635, %v827
        %v860 = vadd.f32 %v636, %v836
        %v861 = vadd.f32 %v637, %v845
        %v862 = vld [vmem:[%s3] sm:$0xff]
        %v863 = vld [vmem:[%s3 + $0x8] sm:$0xff]
        %v864 = vld [vmem:[%s3 + $0x10] sm:$0xff]
        %v865 = vld [vmem:[%s3 + $0x18] sm:$0xff]
        %v866 = vld [vmem:[%s4] sm:$0xff]
        %v867 = vld [vmem:[%s4 + $0x8] sm:$0xff]
        %v868 = vld [vmem:[%s4 + $0x10] sm:$0xff]
        %v869 = vld [vmem:[%s4 + $0x18] sm:$0xff]
        %871 = vset.pattern.permute.xlu0 0
        %872 = vperm.xlu0 %871, %v866
        %v873 = vpop.permute.xlu0 %872
        %876 = vset.pattern.permute.xlu0 0
        %877 = vperm.xlu0 %876, %v867
        %v878 = vpop.permute.xlu0 %877
        %881 = vset.pattern.permute.xlu0 0
        %882 = vperm.xlu0 %881, %v868
        %v883 = vpop.permute.xlu0 %882
        %886 = vset.pattern.permute.xlu0 0
        %887 = vperm.xlu0 %886, %v869
        %v888 = vpop.permute.xlu0 %887
        %vm890 = vcmask 261120
        %v892 = vsel %vm890, %v862, 0
        %v895 = vsel %vm890, %v863, 0
        %v898 = vsel %vm890, %v864, 0
        %v901 = vsel %vm890, %v865, 0
        %903 = vmatprep.subr.mxu0 %v847
        %904 = vmatpush1.msra.mxu0 %v846
        %905 = vmatprep.subr.mxu0 %v851
        %906 = vmatpush1.msra.mxu0 %v850
        %907 = vmatprep.subr.mxu0 %v855
        %908 = vmatpush1.msra.mxu0 %v854
        %909 = vmatprep.subr.mxu0 %v859
        %910 = vmatpush1.msra.mxu0 %v858
        %911 = vmatprep.subr.mxu0 0.0
        %912 = vmatpush1.msra.mxu0 0.0
        %913 = vmatprep.subr.mxu0 0.0
        %914 = vmatpush1.msra.mxu0 0.0
        %915 = vmatprep.subr.mxu0 0.0
        %916 = vmatpush1.msra.mxu0 0.0
        %917 = vmatprep.subr.mxu0 0.0
        %918 = vmatpush1.msra.mxu0 0.0
        %919 = vmatprep.subr.mxu0 0.0
        %920 = vmatpush1.msra.mxu0 0.0
        %921 = vmatprep.subr.mxu0 0.0
        %922 = vmatpush1.msra.mxu0 0.0
        %923 = vmatprep.subr.mxu0 0.0
        %924 = vmatpush1.msra.mxu0 0.0
        %925 = vmatprep.subr.mxu0 0.0
        %926 = vmatpush1.msra.mxu0 0.0
        %927 = vmatprep.subr.mxu0 0.0
        %928 = vmatpush1.msra.mxu0 0.0
        %929 = vmatprep.subr.mxu0 0.0
        %930 = vmatpush1.msra.mxu0 0.0
        %931 = vmatprep.subr.mxu0 0.0
        %932 = vmatpush1.msra.mxu0 0.0
        %933 = vmatprep.subr.mxu0 0.0
        %934 = vmatpush1.msra.mxu0 0.0
        %935 = vmatprep.subr.mxu0 0.0
        %936 = vmatpush1.msra.mxu0 0.0
        %937 = vmatprep.subr.mxu0 0.0
        %938 = vmatpush1.msra.mxu0 0.0
        %939 = vmatprep.subr.mxu0 0.0
        %940 = vmatpush1.msra.mxu0 0.0
        %941 = vmatprep.subr.mxu0 0.0
        %942 = vmatpush1.msra.mxu0 0.0
        %943 = vmatprep.subr.mxu0 0.0
        %944 = vmatpush1.msra.mxu0 0.0
        %945 = vmatprep.subr.mxu0 0.0
        %946 = vmatpush1.msra.mxu0 0.0
        %947 = vmatprep.subr.mxu0 0.0
        %948 = vmatpush1.msra.mxu0 0.0
        %949 = vmatprep.subr.mxu0 0.0
        %950 = vmatpush1.msra.mxu0 0.0
        %951 = vmatprep.subr.mxu0 0.0
        %952 = vmatpush1.msra.mxu0 0.0
        %953 = vmatprep.subr.mxu0 0.0
        %954 = vmatpush1.msra.mxu0 0.0
        %955 = vmatprep.subr.mxu0 0.0
        %956 = vmatpush1.msra.mxu0 0.0
        %957 = vmatprep.subr.mxu0 0.0
        %958 = vmatpush1.msra.mxu0 0.0
        %959 = vmatprep.subr.mxu0 0.0
        %960 = vmatpush1.msra.mxu0 0.0
        %961 = vmatprep.subr.mxu0 0.0
        %962 = vmatpush1.msra.mxu0 0.0
        %963 = vmatprep.subr.mxu0 0.0
        %964 = vmatpush1.msra.mxu0 0.0
        %965 = vmatprep.subr.mxu0 0.0
        %966 = vmatpush1.msra.mxu0 0.0
        %967 = vmatprep.mubr.f32.mxu0 0.0
        %968 = vmatmul.mubr.f32.gmra.mrb[0].mxu0 %v892
        %v969 = vpop.f32.mrb[0].mxu0
        %v970 = vadd.f32 %v873, %v969
        %v971 = vpop.f32.mrb[0].mxu0
        %v972 = vadd.f32 %v873, %v971
        %973 = vmatprep.mubr.f32.mxu0 0.0
        %974 = vmatmul.mubr.f32.gmra.mrb[0].mxu0 %v895
        %v975 = vpop.f32.mrb[0].mxu0
        %v976 = vadd.f32 %v878, %v975
        %v977 = vpop.f32.mrb[0].mxu0
        %v978 = vadd.f32 %v878, %v977
        %979 = vmatprep.mubr.f32.mxu0 0.0
        %980 = vmatmul.mubr.f32.gmra.mrb[0].mxu0 %v898
        %v981 = vpop.f32.mrb[0].mxu0
        %v982 = vadd.f32 %v883, %v981
        %v983 = vpop.f32.mrb[0].mxu0
        %v984 = vadd.f32 %v883, %v983
        %985 = vmatprep.mubr.f32.mxu0 0.0
        %986 = vmatmul.mubr.f32.gmra.mrb[0].mxu0 %v901
        %v987 = vpop.f32.mrb[0].mxu0
        %v988 = vadd.f32 %v888, %v987
        %v989 = vpop.f32.mrb[0].mxu0
        %v990 = vadd.f32 %v888, %v989
        %991 = vdwg.mxu0
        %992 = vmatprep.subr.mxu0 %v849
        %993 = vmatpush1.msra.mxu0 %v848
        %994 = vmatprep.subr.mxu0 %v853
        %995 = vmatpush1.msra.mxu0 %v852
        %996 = vmatprep.subr.mxu0 %v857
        %997 = vmatpush1.msra.mxu0 %v856
        %998 = vmatprep.subr.mxu0 %v861
        %999 = vmatpush1.msra.mxu0 %v860
        %1000 = vmatprep.subr.mxu0 0.0
        %1001 = vmatpush1.msra.mxu0 0.0
        %1002 = vmatprep.subr.mxu0 0.0
        %1003 = vmatpush1.msra.mxu0 0.0
        %1004 = vmatprep.subr.mxu0 0.0
        %1005 = vmatpush1.msra.mxu0 0.0
        %1006 = vmatprep.subr.mxu0 0.0
        %1007 = vmatpush1.msra.mxu0 0.0
        %1008 = vmatprep.subr.mxu0 0.0
        %1009 = vmatpush1.msra.mxu0 0.0
        %1010 = vmatprep.subr.mxu0 0.0
        %1011 = vmatpush1.msra.mxu0 0.0
        %1012 = vmatprep.subr.mxu0 0.0
        %1013 = vmatpush1.msra.mxu0 0.0
        %1014 = vmatprep.subr.mxu0 0.0
        %1015 = vmatpush1.msra.mxu0 0.0
        %1016 = vmatprep.subr.mxu0 0.0
        %1017 = vmatpush1.msra.mxu0 0.0
        %1018 = vmatprep.subr.mxu0 0.0
        %1019 = vmatpush1.msra.mxu0 0.0
        %1020 = vmatprep.subr.mxu0 0.0
        %1021 = vmatpush1.msra.mxu0 0.0
        %1022 = vmatprep.subr.mxu0 0.0
        %1023 = vmatpush1.msra.mxu0 0.0
        %1024 = vmatprep.subr.mxu0 0.0
        %1025 = vmatpush1.msra.mxu0 0.0
        %1026 = vmatprep.subr.mxu0 0.0
        %1027 = vmatpush1.msra.mxu0 0.0
        %1028 = vmatprep.subr.mxu0 0.0
        %1029 = vmatpush1.msra.mxu0 0.0
        %1030 = vmatprep.subr.mxu0 0.0
        %1031 = vmatpush1.msra.mxu0 0.0
        %1032 = vmatprep.subr.mxu0 0.0
        %1033 = vmatpush1.msra.mxu0 0.0
        %1034 = vmatprep.subr.mxu0 0.0
        %1035 = vmatpush1.msra.mxu0 0.0
        %1036 = vmatprep.subr.mxu0 0.0
        %1037 = vmatpush1.msra.mxu0 0.0
        %1038 = vmatprep.subr.mxu0 0.0
        %1039 = vmatpush1.msra.mxu0 0.0
        %1040 = vmatprep.subr.mxu0 0.0
        %1041 = vmatpush1.msra.mxu0 0.0
        %1042 = vmatprep.subr.mxu0 0.0
        %1043 = vmatpush1.msra.mxu0 0.0
        %1044 = vmatprep.subr.mxu0 0.0
        %1045 = vmatpush1.msra.mxu0 0.0
        %1046 = vmatprep.subr.mxu0 0.0
        %1047 = vmatpush1.msra.mxu0 0.0
        %1048 = vmatprep.subr.mxu0 0.0
        %1049 = vmatpush1.msra.mxu0 0.0
        %1050 = vmatprep.subr.mxu0 0.0
        %1051 = vmatpush1.msra.mxu0 0.0
        %1052 = vmatprep.subr.mxu0 0.0
        %1053 = vmatpush1.msra.mxu0 0.0
        %1054 = vmatprep.subr.mxu0 0.0
        %1055 = vmatpush1.msra.mxu0 0.0
        %1056 = vmatprep.mubr.f32.mxu0 0.0
        %1057 = vmatmul.mubr.f32.gmra.mrb[0].mxu0 %v892
        %v1058 = vpop.f32.mrb[0].mxu0
        %v1059 = vadd.f32 %v873, %v1058
        %v1060 = vpop.f32.mrb[0].mxu0
        %v1061 = vadd.f32 %v873, %v1060
        %1062 = vmatprep.mubr.f32.mxu0 0.0
        %1063 = vmatmul.mubr.f32.gmra.mrb[0].mxu0 %v895
        %v1064 = vpop.f32.mrb[0].mxu0
        %v1065 = vadd.f32 %v878, %v1064
        %v1066 = vpop.f32.mrb[0].mxu0
        %v1067 = vadd.f32 %v878, %v1066
        %1068 = vmatprep.mubr.f32.mxu0 0.0
        %1069 = vmatmul.mubr.f32.gmra.mrb[0].mxu0 %v898
        %v1070 = vpop.f32.mrb[0].mxu0
        %v1071 = vadd.f32 %v883, %v1070
        %v1072 = vpop.f32.mrb[0].mxu0
        %v1073 = vadd.f32 %v883, %v1072
        %1074 = vmatprep.mubr.f32.mxu0 0.0
        %1075 = vmatmul.mubr.f32.gmra.mrb[0].mxu0 %v901
        %v1076 = vpop.f32.mrb[0].mxu0
        %v1077 = vadd.f32 %v888, %v1076
        %v1078 = vpop.f32.mrb[0].mxu0
        %v1079 = vadd.f32 %v888, %v1078
        %1080 = vdwg.mxu0
        %v1081 = vmax.f32 %v970, 0.0
        %v1082 = vmax.f32 %v972, 0.0
        %v1083 = vmax.f32 %v1059, 0.0
        %v1084 = vmax.f32 %v1061, 0.0
        %v1085 = vmax.f32 %v976, 0.0
        %v1086 = vmax.f32 %v978, 0.0
        %v1087 = vmax.f32 %v1065, 0.0
        %v1088 = vmax.f32 %v1067, 0.0
        %v1089 = vmax.f32 %v982, 0.0
        %v1090 = vmax.f32 %v984, 0.0
        %v1091 = vmax.f32 %v1071, 0.0
        %v1092 = vmax.f32 %v1073, 0.0
        %v1093 = vmax.f32 %v988, 0.0
        %v1094 = vmax.f32 %v990, 0.0
        %v1095 = vmax.f32 %v1077, 0.0
        %v1096 = vmax.f32 %v1079, 0.0
        %v1097 = vand.u32 2147483647, %v970
        %v1098 = vand.u32 2147483647, %v972
        %v1099 = vand.u32 2147483647, %v1059
        %v1100 = vand.u32 2147483647, %v1061
        %v1101 = vand.u32 2147483647, %v976
        %v1102 = vand.u32 2147483647, %v978
        %v1103 = vand.u32 2147483647, %v1065
        %v1104 = vand.u32 2147483647, %v1067
        %v1105 = vand.u32 2147483647, %v982
        %v1106 = vand.u32 2147483647, %v984
        %v1107 = vand.u32 2147483647, %v1071
        %v1108 = vand.u32 2147483647, %v1073
        %v1109 = vand.u32 2147483647, %v988
        %v1110 = vand.u32 2147483647, %v990
        %v1111 = vand.u32 2147483647, %v1077
        %v1112 = vand.u32 2147483647, %v1079
        %v1113 = vsub.f32 0.0, %v1097
        %v1114 = vsub.f32 0.0, %v1098
        %v1115 = vsub.f32 0.0, %v1099
        %v1116 = vsub.f32 0.0, %v1100
        %v1117 = vsub.f32 0.0, %v1101
        %v1118 = vsub.f32 0.0, %v1102
        %v1119 = vsub.f32 0.0, %v1103
        %v1120 = vsub.f32 0.0, %v1104
        %v1121 = vsub.f32 0.0, %v1105
        %v1122 = vsub.f32 0.0, %v1106
        %v1123 = vsub.f32 0.0, %v1107
        %v1124 = vsub.f32 0.0, %v1108
        %v1125 = vsub.f32 0.0, %v1109
        %v1126 = vsub.f32 0.0, %v1110
        %v1127 = vsub.f32 0.0, %v1111
        %v1128 = vsub.f32 0.0, %v1112
        %v1129 = vmul.f32 %v1113, 1.442695
        %v1130 = vpow.pop %v1129
        %v1131 = vmul.f32 %v1114, 1.442695
        %v1132 = vpow.pop %v1131
        %v1133 = vmul.f32 %v1115, 1.442695
        %v1134 = vpow.pop %v1133
        %v1135 = vmul.f32 %v1116, 1.442695
        %v1136 = vpow.pop %v1135
        %v1137 = vmul.f32 %v1117, 1.442695
        %v1138 = vpow.pop %v1137
        %v1139 = vmul.f32 %v1118, 1.442695
        %v1140 = vpow.pop %v1139
        %v1141 = vmul.f32 %v1119, 1.442695
        %v1142 = vpow.pop %v1141
        %v1143 = vmul.f32 %v1120, 1.442695
        %v1144 = vpow.pop %v1143
        %v1145 = vmul.f32 %v1121, 1.442695
        %v1146 = vpow.pop %v1145
        %v1147 = vmul.f32 %v1122, 1.442695
        %v1148 = vpow.pop %v1147
        %v1149 = vmul.f32 %v1123, 1.442695
        %v1150 = vpow.pop %v1149
        %v1151 = vmul.f32 %v1124, 1.442695
        %v1152 = vpow.pop %v1151
        %v1153 = vmul.f32 %v1125, 1.442695
        %v1154 = vpow.pop %v1153
        %v1155 = vmul.f32 %v1126, 1.442695
        %v1156 = vpow.pop %v1155
        %v1157 = vmul.f32 %v1127, 1.442695
        %v1158 = vpow.pop %v1157
        %v1159 = vmul.f32 %v1128, 1.442695
        %v1160 = vpow.pop %v1159
        %v1161 = vadd.f32 %v1130, 1.0
        %v1162 = vlog2.pop %v1161
        %v1163 = vmul.f32 %v1162, 0.6931472
        %v1164 = vmul.f32 -0.5, %v1130
        %v1165 = vadd.f32 %v1164, 1.0
        %v1166 = vmul.f32 %v1165, %v1130
        %v1167 = vand.u32 2147483647, %v1130
        %vm1168 = vcmp.lt.f32.partialorder %v1167, 0.0004427343
        %v1169 = vsel %vm1168, %v1166, %v1163
        %v1170 = vadd.f32 %v1132, 1.0
        %v1171 = vlog2.pop %v1170
        %v1172 = vmul.f32 %v1171, 0.6931472
        %v1173 = vmul.f32 -0.5, %v1132
        %v1174 = vadd.f32 %v1173, 1.0
        %v1175 = vmul.f32 %v1174, %v1132
        %v1176 = vand.u32 2147483647, %v1132
        %vm1177 = vcmp.lt.f32.partialorder %v1176, 0.0004427343
        %v1178 = vsel %vm1177, %v1175, %v1172
        %v1179 = vadd.f32 %v1134, 1.0
        %v1180 = vlog2.pop %v1179
        %v1181 = vmul.f32 %v1180, 0.6931472
        %v1182 = vmul.f32 -0.5, %v1134
        %v1183 = vadd.f32 %v1182, 1.0
        %v1184 = vmul.f32 %v1183, %v1134
        %v1185 = vand.u32 2147483647, %v1134
        %vm1186 = vcmp.lt.f32.partialorder %v1185, 0.0004427343
        %v1187 = vsel %vm1186, %v1184, %v1181
        %v1188 = vadd.f32 %v1136, 1.0
        %v1189 = vlog2.pop %v1188
        %v1190 = vmul.f32 %v1189, 0.6931472
        %v1191 = vmul.f32 -0.5, %v1136
        %v1192 = vadd.f32 %v1191, 1.0
        %v1193 = vmul.f32 %v1192, %v1136
        %v1194 = vand.u32 2147483647, %v1136
        %vm1195 = vcmp.lt.f32.partialorder %v1194, 0.0004427343
        %v1196 = vsel %vm1195, %v1193, %v1190
        %v1197 = vadd.f32 %v1138, 1.0
        %v1198 = vlog2.pop %v1197
        %v1199 = vmul.f32 %v1198, 0.6931472
        %v1200 = vmul.f32 -0.5, %v1138
        %v1201 = vadd.f32 %v1200, 1.0
        %v1202 = vmul.f32 %v1201, %v1138
        %v1203 = vand.u32 2147483647, %v1138
        %vm1204 = vcmp.lt.f32.partialorder %v1203, 0.0004427343
        %v1205 = vsel %vm1204, %v1202, %v1199
        %v1206 = vadd.f32 %v1140, 1.0
        %v1207 = vlog2.pop %v1206
        %v1208 = vmul.f32 %v1207, 0.6931472
        %v1209 = vmul.f32 -0.5, %v1140
        %v1210 = vadd.f32 %v1209, 1.0
        %v1211 = vmul.f32 %v1210, %v1140
        %v1212 = vand.u32 2147483647, %v1140
        %vm1213 = vcmp.lt.f32.partialorder %v1212, 0.0004427343
        %v1214 = vsel %vm1213, %v1211, %v1208
        %v1215 = vadd.f32 %v1142, 1.0
        %v1216 = vlog2.pop %v1215
        %v1217 = vmul.f32 %v1216, 0.6931472
        %v1218 = vmul.f32 -0.5, %v1142
        %v1219 = vadd.f32 %v1218, 1.0
        %v1220 = vmul.f32 %v1219, %v1142
        %v1221 = vand.u32 2147483647, %v1142
        %vm1222 = vcmp.lt.f32.partialorder %v1221, 0.0004427343
        %v1223 = vsel %vm1222, %v1220, %v1217
        %v1224 = vadd.f32 %v1144, 1.0
        %v1225 = vlog2.pop %v1224
        %v1226 = vmul.f32 %v1225, 0.6931472
        %v1227 = vmul.f32 -0.5, %v1144
        %v1228 = vadd.f32 %v1227, 1.0
        %v1229 = vmul.f32 %v1228, %v1144
        %v1230 = vand.u32 2147483647, %v1144
        %vm1231 = vcmp.lt.f32.partialorder %v1230, 0.0004427343
        %v1232 = vsel %vm1231, %v1229, %v1226
        %v1233 = vadd.f32 %v1146, 1.0
        %v1234 = vlog2.pop %v1233
        %v1235 = vmul.f32 %v1234, 0.6931472
        %v1236 = vmul.f32 -0.5, %v1146
        %v1237 = vadd.f32 %v1236, 1.0
        %v1238 = vmul.f32 %v1237, %v1146
        %v1239 = vand.u32 2147483647, %v1146
        %vm1240 = vcmp.lt.f32.partialorder %v1239, 0.0004427343
        %v1241 = vsel %vm1240, %v1238, %v1235
        %v1242 = vadd.f32 %v1148, 1.0
        %v1243 = vlog2.pop %v1242
        %v1244 = vmul.f32 %v1243, 0.6931472
        %v1245 = vmul.f32 -0.5, %v1148
        %v1246 = vadd.f32 %v1245, 1.0
        %v1247 = vmul.f32 %v1246, %v1148
        %v1248 = vand.u32 2147483647, %v1148
        %vm1249 = vcmp.lt.f32.partialorder %v1248, 0.0004427343
        %v1250 = vsel %vm1249, %v1247, %v1244
        %v1251 = vadd.f32 %v1150, 1.0
        %v1252 = vlog2.pop %v1251
        %v1253 = vmul.f32 %v1252, 0.6931472
        %v1254 = vmul.f32 -0.5, %v1150
        %v1255 = vadd.f32 %v1254, 1.0
        %v1256 = vmul.f32 %v1255, %v1150
        %v1257 = vand.u32 2147483647, %v1150
        %vm1258 = vcmp.lt.f32.partialorder %v1257, 0.0004427343
        %v1259 = vsel %vm1258, %v1256, %v1253
        %v1260 = vadd.f32 %v1152, 1.0
        %v1261 = vlog2.pop %v1260
        %v1262 = vmul.f32 %v1261, 0.6931472
        %v1263 = vmul.f32 -0.5, %v1152
        %v1264 = vadd.f32 %v1263, 1.0
        %v1265 = vmul.f32 %v1264, %v1152
        %v1266 = vand.u32 2147483647, %v1152
        %vm1267 = vcmp.lt.f32.partialorder %v1266, 0.0004427343
        %v1268 = vsel %vm1267, %v1265, %v1262
        %v1269 = vadd.f32 %v1154, 1.0
        %v1270 = vlog2.pop %v1269
        %v1271 = vmul.f32 %v1270, 0.6931472
        %v1272 = vmul.f32 -0.5, %v1154
        %v1273 = vadd.f32 %v1272, 1.0
        %v1274 = vmul.f32 %v1273, %v1154
        %v1275 = vand.u32 2147483647, %v1154
        %vm1276 = vcmp.lt.f32.partialorder %v1275, 0.0004427343
        %v1277 = vsel %vm1276, %v1274, %v1271
        %v1278 = vadd.f32 %v1156, 1.0
        %v1279 = vlog2.pop %v1278
        %v1280 = vmul.f32 %v1279, 0.6931472
        %v1281 = vmul.f32 -0.5, %v1156
        %v1282 = vadd.f32 %v1281, 1.0
        %v1283 = vmul.f32 %v1282, %v1156
        %v1284 = vand.u32 2147483647, %v1156
        %vm1285 = vcmp.lt.f32.partialorder %v1284, 0.0004427343
        %v1286 = vsel %vm1285, %v1283, %v1280
        %v1287 = vadd.f32 %v1158, 1.0
        %v1288 = vlog2.pop %v1287
        %v1289 = vmul.f32 %v1288, 0.6931472
        %v1290 = vmul.f32 -0.5, %v1158
        %v1291 = vadd.f32 %v1290, 1.0
        %v1292 = vmul.f32 %v1291, %v1158
        %v1293 = vand.u32 2147483647, %v1158
        %vm1294 = vcmp.lt.f32.partialorder %v1293, 0.0004427343
        %v1295 = vsel %vm1294, %v1292, %v1289
        %v1296 = vadd.f32 %v1160, 1.0
        %v1297 = vlog2.pop %v1296
        %v1298 = vmul.f32 %v1297, 0.6931472
        %v1299 = vmul.f32 -0.5, %v1160
        %v1300 = vadd.f32 %v1299, 1.0
        %v1301 = vmul.f32 %v1300, %v1160
        %v1302 = vand.u32 2147483647, %v1160
        %vm1303 = vcmp.lt.f32.partialorder %v1302, 0.0004427343
        %v1304 = vsel %vm1303, %v1301, %v1298
        %v1305 = vadd.f32 %v1081, %v1169
        %v1306 = vadd.f32 %v1082, %v1178
        %v1307 = vadd.f32 %v1083, %v1187
        %v1308 = vadd.f32 %v1084, %v1196
        %v1309 = vadd.f32 %v1085, %v1205
        %v1310 = vadd.f32 %v1086, %v1214
        %v1311 = vadd.f32 %v1087, %v1223
        %v1312 = vadd.f32 %v1088, %v1232
        %v1313 = vadd.f32 %v1089, %v1241
        %v1314 = vadd.f32 %v1090, %v1250
        %v1315 = vadd.f32 %v1091, %v1259
        %v1316 = vadd.f32 %v1092, %v1268
        %v1317 = vadd.f32 %v1093, %v1277
        %v1318 = vadd.f32 %v1094, %v1286
        %v1319 = vadd.f32 %v1095, %v1295
        %v1320 = vadd.f32 %v1096, %v1304
        %v1321 = vld [vmem:[%s5] sm:$0xff]
        %v1322 = vld [vmem:[%s5 + $0x8] sm:$0xff]
        %v1323 = vld [vmem:[%s5 + $0x10] sm:$0xff]
        %v1324 = vld [vmem:[%s5 + $0x18] sm:$0xff]
        %v1325 = vld [vmem:[%s6] sm:$0xff]
        %v1326 = vld [vmem:[%s6 + $0x8] sm:$0xff]
        %v1327 = vld [vmem:[%s6 + $0x10] sm:$0xff]
        %v1328 = vld [vmem:[%s6 + $0x18] sm:$0xff]
        %1330 = vset.pattern.permute.xlu0 0
        %1331 = vperm.xlu0 %1330, %v1325
        %v1332 = vpop.permute.xlu0 %1331
        %1335 = vset.pattern.permute.xlu0 0
        %1336 = vperm.xlu0 %1335, %v1326
        %v1337 = vpop.permute.xlu0 %1336
        %1340 = vset.pattern.permute.xlu0 0
        %1341 = vperm.xlu0 %1340, %v1327
        %v1342 = vpop.permute.xlu0 %1341
        %1345 = vset.pattern.permute.xlu0 0
        %1346 = vperm.xlu0 %1345, %v1328
        %v1347 = vpop.permute.xlu0 %1346
        %v1350 = vsel %vm890, %v1321, 0
        %v1353 = vsel %vm890, %v1322, 0
        %v1356 = vsel %vm890, %v1323, 0
        %v1359 = vsel %vm890, %v1324, 0
        %1361 = vmatprep.subr.mxu0 %v1306
        %1362 = vmatpush1.msra.mxu0 %v1305
        %1363 = vmatprep.subr.mxu0 %v1310
        %1364 = vmatpush1.msra.mxu0 %v1309
        %1365 = vmatprep.subr.mxu0 %v1314
        %1366 = vmatpush1.msra.mxu0 %v1313
        %1367 = vmatprep.subr.mxu0 %v1318
        %1368 = vmatpush1.msra.mxu0 %v1317
        %1369 = vmatprep.subr.mxu0 0.0
        %1370 = vmatpush1.msra.mxu0 0.0
        %1371 = vmatprep.subr.mxu0 0.0
        %1372 = vmatpush1.msra.mxu0 0.0
        %1373 = vmatprep.subr.mxu0 0.0
        %1374 = vmatpush1.msra.mxu0 0.0
        %1375 = vmatprep.subr.mxu0 0.0
        %1376 = vmatpush1.msra.mxu0 0.0
        %1377 = vmatprep.subr.mxu0 0.0
        %1378 = vmatpush1.msra.mxu0 0.0
        %1379 = vmatprep.subr.mxu0 0.0
        %1380 = vmatpush1.msra.mxu0 0.0
        %1381 = vmatprep.subr.mxu0 0.0
        %1382 = vmatpush1.msra.mxu0 0.0
        %1383 = vmatprep.subr.mxu0 0.0
        %1384 = vmatpush1.msra.mxu0 0.0
        %1385 = vmatprep.subr.mxu0 0.0
        %1386 = vmatpush1.msra.mxu0 0.0
        %1387 = vmatprep.subr.mxu0 0.0
        %1388 = vmatpush1.msra.mxu0 0.0
        %1389 = vmatprep.subr.mxu0 0.0
        %1390 = vmatpush1.msra.mxu0 0.0
        %1391 = vmatprep.subr.mxu0 0.0
        %1392 = vmatpush1.msra.mxu0 0.0
        %1393 = vmatprep.subr.mxu0 0.0
        %1394 = vmatpush1.msra.mxu0 0.0
        %1395 = vmatprep.subr.mxu0 0.0
        %1396 = vmatpush1.msra.mxu0 0.0
        %1397 = vmatprep.subr.mxu0 0.0
        %1398 = vmatpush1.msra.mxu0 0.0
        %1399 = vmatprep.subr.mxu0 0.0
        %1400 = vmatpush1.msra.mxu0 0.0
        %1401 = vmatprep.subr.mxu0 0.0
        %1402 = vmatpush1.msra.mxu0 0.0
        %1403 = vmatprep.subr.mxu0 0.0
        %1404 = vmatpush1.msra.mxu0 0.0
        %1405 = vmatprep.subr.mxu0 0.0
        %1406 = vmatpush1.msra.mxu0 0.0
        %1407 = vmatprep.subr.mxu0 0.0
        %1408 = vmatpush1.msra.mxu0 0.0
        %1409 = vmatprep.subr.mxu0 0.0
        %1410 = vmatpush1.msra.mxu0 0.0
        %1411 = vmatprep.subr.mxu0 0.0
        %1412 = vmatpush1.msra.mxu0 0.0
        %1413 = vmatprep.subr.mxu0 0.0
        %1414 = vmatpush1.msra.mxu0 0.0
        %1415 = vmatprep.subr.mxu0 0.0
        %1416 = vmatpush1.msra.mxu0 0.0
        %1417 = vmatprep.subr.mxu0 0.0
        %1418 = vmatpush1.msra.mxu0 0.0
        %1419 = vmatprep.subr.mxu0 0.0
        %1420 = vmatpush1.msra.mxu0 0.0
        %1421 = vmatprep.subr.mxu0 0.0
        %1422 = vmatpush1.msra.mxu0 0.0
        %1423 = vmatprep.subr.mxu0 0.0
        %1424 = vmatpush1.msra.mxu0 0.0
        %1425 = vmatprep.mubr.f32.mxu0 0.0
        %1426 = vmatmul.mubr.f32.gmra.mrb[0].mxu0 %v1350
        %v1427 = vpop.f32.mrb[0].mxu0
        %v1428 = vadd.f32 %v1332, %v1427
        %v1429 = vpop.f32.mrb[0].mxu0
        %v1430 = vadd.f32 %v1332, %v1429
        %1431 = vmatprep.mubr.f32.mxu0 0.0
        %1432 = vmatmul.mubr.f32.gmra.mrb[0].mxu0 %v1353
        %v1433 = vpop.f32.mrb[0].mxu0
        %v1434 = vadd.f32 %v1337, %v1433
        %v1435 = vpop.f32.mrb[0].mxu0
        %v1436 = vadd.f32 %v1337, %v1435
        %1437 = vmatprep.mubr.f32.mxu0 0.0
        %1438 = vmatmul.mubr.f32.gmra.mrb[0].mxu0 %v1356
        %v1439 = vpop.f32.mrb[0].mxu0
        %v1440 = vadd.f32 %v1342, %v1439
        %v1441 = vpop.f32.mrb[0].mxu0
        %v1442 = vadd.f32 %v1342, %v1441
        %1443 = vmatprep.mubr.f32.mxu0 0.0
        %1444 = vmatmul.mubr.f32.gmra.mrb[0].mxu0 %v1359
        %v1445 = vpop.f32.mrb[0].mxu0
        %v1446 = vadd.f32 %v1347, %v1445
        %v1447 = vpop.f32.mrb[0].mxu0
        %v1448 = vadd.f32 %v1347, %v1447
        %1449 = vdwg.mxu0
        %1450 = vmatprep.subr.mxu0 %v1308
        %1451 = vmatpush1.msra.mxu0 %v1307
        %1452 = vmatprep.subr.mxu0 %v1312
        %1453 = vmatpush1.msra.mxu0 %v1311
        %1454 = vmatprep.subr.mxu0 %v1316
        %1455 = vmatpush1.msra.mxu0 %v1315
        %1456 = vmatprep.subr.mxu0 %v1320
        %1457 = vmatpush1.msra.mxu0 %v1319
        %1458 = vmatprep.subr.mxu0 0.0
        %1459 = vmatpush1.msra.mxu0 0.0
        %1460 = vmatprep.subr.mxu0 0.0
        %1461 = vmatpush1.msra.mxu0 0.0
        %1462 = vmatprep.subr.mxu0 0.0
        %1463 = vmatpush1.msra.mxu0 0.0
        %1464 = vmatprep.subr.mxu0 0.0
        %1465 = vmatpush1.msra.mxu0 0.0
        %1466 = vmatprep.subr.mxu0 0.0
        %1467 = vmatpush1.msra.mxu0 0.0
        %1468 = vmatprep.subr.mxu0 0.0
        %1469 = vmatpush1.msra.mxu0 0.0
        %1470 = vmatprep.subr.mxu0 0.0
        %1471 = vmatpush1.msra.mxu0 0.0
        %1472 = vmatprep.subr.mxu0 0.0
        %1473 = vmatpush1.msra.mxu0 0.0
        %1474 = vmatprep.subr.mxu0 0.0
        %1475 = vmatpush1.msra.mxu0 0.0
        %1476 = vmatprep.subr.mxu0 0.0
        %1477 = vmatpush1.msra.mxu0 0.0
        %1478 = vmatprep.subr.mxu0 0.0
        %1479 = vmatpush1.msra.mxu0 0.0
        %1480 = vmatprep.subr.mxu0 0.0
        %1481 = vmatpush1.msra.mxu0 0.0
        %1482 = vmatprep.subr.mxu0 0.0
        %1483 = vmatpush1.msra.mxu0 0.0
        %1484 = vmatprep.subr.mxu0 0.0
        %1485 = vmatpush1.msra.mxu0 0.0
        %1486 = vmatprep.subr.mxu0 0.0
        %1487 = vmatpush1.msra.mxu0 0.0
        %1488 = vmatprep.subr.mxu0 0.0
        %1489 = vmatpush1.msra.mxu0 0.0
        %1490 = vmatprep.subr.mxu0 0.0
        %1491 = vmatpush1.msra.mxu0 0.0
        %1492 = vmatprep.subr.mxu0 0.0
        %1493 = vmatpush1.msra.mxu0 0.0
        %1494 = vmatprep.subr.mxu0 0.0
        %1495 = vmatpush1.msra.mxu0 0.0
        %1496 = vmatprep.subr.mxu0 0.0
        %1497 = vmatpush1.msra.mxu0 0.0
        %1498 = vmatprep.subr.mxu0 0.0
        %1499 = vmatpush1.msra.mxu0 0.0
        %1500 = vmatprep.subr.mxu0 0.0
        %1501 = vmatpush1.msra.mxu0 0.0
        %1502 = vmatprep.subr.mxu0 0.0
        %1503 = vmatpush1.msra.mxu0 0.0
        %1504 = vmatprep.subr.mxu0 0.0
        %1505 = vmatpush1.msra.mxu0 0.0
        %1506 = vmatprep.subr.mxu0 0.0
        %1507 = vmatpush1.msra.mxu0 0.0
        %1508 = vmatprep.subr.mxu0 0.0
        %1509 = vmatpush1.msra.mxu0 0.0
        %1510 = vmatprep.subr.mxu0 0.0
        %1511 = vmatpush1.msra.mxu0 0.0
        %1512 = vmatprep.subr.mxu0 0.0
        %1513 = vmatpush1.msra.mxu0 0.0
        %1514 = vmatprep.mubr.f32.mxu0 0.0
        %1515 = vmatmul.mubr.f32.gmra.mrb[0].mxu0 %v1350
        %v1516 = vpop.f32.mrb[0].mxu0
        %v1517 = vadd.f32 %v1332, %v1516
        %v1518 = vpop.f32.mrb[0].mxu0
        %v1519 = vadd.f32 %v1332, %v1518
        %1520 = vmatprep.mubr.f32.mxu0 0.0
        %1521 = vmatmul.mubr.f32.gmra.mrb[0].mxu0 %v1353
        %v1522 = vpop.f32.mrb[0].mxu0
        %v1523 = vadd.f32 %v1337, %v1522
        %v1524 = vpop.f32.mrb[0].mxu0
        %v1525 = vadd.f32 %v1337, %v1524
        %1526 = vmatprep.mubr.f32.mxu0 0.0
        %1527 = vmatmul.mubr.f32.gmra.mrb[0].mxu0 %v1356
        %v1528 = vpop.f32.mrb[0].mxu0
        %v1529 = vadd.f32 %v1342, %v1528
        %v1530 = vpop.f32.mrb[0].mxu0
        %v1531 = vadd.f32 %v1342, %v1530
        %1532 = vmatprep.mubr.f32.mxu0 0.0
        %1533 = vmatmul.mubr.f32.gmra.mrb[0].mxu0 %v1359
        %v1534 = vpop.f32.mrb[0].mxu0
        %v1535 = vadd.f32 %v1347, %v1534
        %v1536 = vpop.f32.mrb[0].mxu0
        %v1537 = vadd.f32 %v1347, %v1536
        %1538 = vdwg.mxu0
        %v1539 = vmax.f32 %v1428, 0.0
        %v1540 = vmax.f32 %v1430, 0.0
        %v1541 = vmax.f32 %v1517, 0.0
        %v1542 = vmax.f32 %v1519, 0.0
        %v1543 = vmax.f32 %v1434, 0.0
        %v1544 = vmax.f32 %v1436, 0.0
        %v1545 = vmax.f32 %v1523, 0.0
        %v1546 = vmax.f32 %v1525, 0.0
        %v1547 = vmax.f32 %v1440, 0.0
        %v1548 = vmax.f32 %v1442, 0.0
        %v1549 = vmax.f32 %v1529, 0.0
        %v1550 = vmax.f32 %v1531, 0.0
        %v1551 = vmax.f32 %v1446, 0.0
        %v1552 = vmax.f32 %v1448, 0.0
        %v1553 = vmax.f32 %v1535, 0.0
        %v1554 = vmax.f32 %v1537, 0.0
        %v1555 = vand.u32 2147483647, %v1428
        %v1556 = vand.u32 2147483647, %v1430
        %v1557 = vand.u32 2147483647, %v1517
        %v1558 = vand.u32 2147483647, %v1519
        %v1559 = vand.u32 2147483647, %v1434
        %v1560 = vand.u32 2147483647, %v1436
        %v1561 = vand.u32 2147483647, %v1523
        %v1562 = vand.u32 2147483647, %v1525
        %v1563 = vand.u32 2147483647, %v1440
        %v1564 = vand.u32 2147483647, %v1442
        %v1565 = vand.u32 2147483647, %v1529
        %v1566 = vand.u32 2147483647, %v1531
        %v1567 = vand.u32 2147483647, %v1446
        %v1568 = vand.u32 2147483647, %v1448
        %v1569 = vand.u32 2147483647, %v1535
        %v1570 = vand.u32 2147483647, %v1537
        %v1571 = vsub.f32 0.0, %v1555
        %v1572 = vsub.f32 0.0, %v1556
        %v1573 = vsub.f32 0.0, %v1557
        %v1574 = vsub.f32 0.0, %v1558
        %v1575 = vsub.f32 0.0, %v1559
        %v1576 = vsub.f32 0.0, %v1560
        %v1577 = vsub.f32 0.0, %v1561
        %v1578 = vsub.f32 0.0, %v1562
        %v1579 = vsub.f32 0.0, %v1563
        %v1580 = vsub.f32 0.0, %v1564
        %v1581 = vsub.f32 0.0, %v1565
        %v1582 = vsub.f32 0.0, %v1566
        %v1583 = vsub.f32 0.0, %v1567
        %v1584 = vsub.f32 0.0, %v1568
        %v1585 = vsub.f32 0.0, %v1569
        %v1586 = vsub.f32 0.0, %v1570
        %v1587 = vmul.f32 %v1571, 1.442695
        %v1588 = vpow.pop %v1587
        %v1589 = vmul.f32 %v1572, 1.442695
        %v1590 = vpow.pop %v1589
        %v1591 = vmul.f32 %v1573, 1.442695
        %v1592 = vpow.pop %v1591
        %v1593 = vmul.f32 %v1574, 1.442695
        %v1594 = vpow.pop %v1593
        %v1595 = vmul.f32 %v1575, 1.442695
        %v1596 = vpow.pop %v1595
        %v1597 = vmul.f32 %v1576, 1.442695
        %v1598 = vpow.pop %v1597
        %v1599 = vmul.f32 %v1577, 1.442695
        %v1600 = vpow.pop %v1599
        %v1601 = vmul.f32 %v1578, 1.442695
        %v1602 = vpow.pop %v1601
        %v1603 = vmul.f32 %v1579, 1.442695
        %v1604 = vpow.pop %v1603
        %v1605 = vmul.f32 %v1580, 1.442695
        %v1606 = vpow.pop %v1605
        %v1607 = vmul.f32 %v1581, 1.442695
        %v1608 = vpow.pop %v1607
        %v1609 = vmul.f32 %v1582, 1.442695
        %v1610 = vpow.pop %v1609
        %v1611 = vmul.f32 %v1583, 1.442695
        %v1612 = vpow.pop %v1611
        %v1613 = vmul.f32 %v1584, 1.442695
        %v1614 = vpow.pop %v1613
        %v1615 = vmul.f32 %v1585, 1.442695
        %v1616 = vpow.pop %v1615
        %v1617 = vmul.f32 %v1586, 1.442695
        %v1618 = vpow.pop %v1617
        %v1619 = vadd.f32 %v1588, 1.0
        %v1620 = vlog2.pop %v1619
        %v1621 = vmul.f32 %v1620, 0.6931472
        %v1622 = vmul.f32 -0.5, %v1588
        %v1623 = vadd.f32 %v1622, 1.0
        %v1624 = vmul.f32 %v1623, %v1588
        %v1625 = vand.u32 2147483647, %v1588
        %vm1626 = vcmp.lt.f32.partialorder %v1625, 0.0004427343
        %v1627 = vsel %vm1626, %v1624, %v1621
        %v1628 = vadd.f32 %v1590, 1.0
        %v1629 = vlog2.pop %v1628
        %v1630 = vmul.f32 %v1629, 0.6931472
        %v1631 = vmul.f32 -0.5, %v1590
        %v1632 = vadd.f32 %v1631, 1.0
        %v1633 = vmul.f32 %v1632, %v1590
        %v1634 = vand.u32 2147483647, %v1590
        %vm1635 = vcmp.lt.f32.partialorder %v1634, 0.0004427343
        %v1636 = vsel %vm1635, %v1633, %v1630
        %v1637 = vadd.f32 %v1592, 1.0
        %v1638 = vlog2.pop %v1637
        %v1639 = vmul.f32 %v1638, 0.6931472
        %v1640 = vmul.f32 -0.5, %v1592
        %v1641 = vadd.f32 %v1640, 1.0
        %v1642 = vmul.f32 %v1641, %v1592
        %v1643 = vand.u32 2147483647, %v1592
        %vm1644 = vcmp.lt.f32.partialorder %v1643, 0.0004427343
        %v1645 = vsel %vm1644, %v1642, %v1639
        %v1646 = vadd.f32 %v1594, 1.0
        %v1647 = vlog2.pop %v1646
        %v1648 = vmul.f32 %v1647, 0.6931472
        %v1649 = vmul.f32 -0.5, %v1594
        %v1650 = vadd.f32 %v1649, 1.0
        %v1651 = vmul.f32 %v1650, %v1594
        %v1652 = vand.u32 2147483647, %v1594
        %vm1653 = vcmp.lt.f32.partialorder %v1652, 0.0004427343
        %v1654 = vsel %vm1653, %v1651, %v1648
        %v1655 = vadd.f32 %v1596, 1.0
        %v1656 = vlog2.pop %v1655
        %v1657 = vmul.f32 %v1656, 0.6931472
        %v1658 = vmul.f32 -0.5, %v1596
        %v1659 = vadd.f32 %v1658, 1.0
        %v1660 = vmul.f32 %v1659, %v1596
        %v1661 = vand.u32 2147483647, %v1596
        %vm1662 = vcmp.lt.f32.partialorder %v1661, 0.0004427343
        %v1663 = vsel %vm1662, %v1660, %v1657
        %v1664 = vadd.f32 %v1598, 1.0
        %v1665 = vlog2.pop %v1664
        %v1666 = vmul.f32 %v1665, 0.6931472
        %v1667 = vmul.f32 -0.5, %v1598
        %v1668 = vadd.f32 %v1667, 1.0
        %v1669 = vmul.f32 %v1668, %v1598
        %v1670 = vand.u32 2147483647, %v1598
        %vm1671 = vcmp.lt.f32.partialorder %v1670, 0.0004427343
        %v1672 = vsel %vm1671, %v1669, %v1666
        %v1673 = vadd.f32 %v1600, 1.0
        %v1674 = vlog2.pop %v1673
        %v1675 = vmul.f32 %v1674, 0.6931472
        %v1676 = vmul.f32 -0.5, %v1600
        %v1677 = vadd.f32 %v1676, 1.0
        %v1678 = vmul.f32 %v1677, %v1600
        %v1679 = vand.u32 2147483647, %v1600
        %vm1680 = vcmp.lt.f32.partialorder %v1679, 0.0004427343
        %v1681 = vsel %vm1680, %v1678, %v1675
        %v1682 = vadd.f32 %v1602, 1.0
        %v1683 = vlog2.pop %v1682
        %v1684 = vmul.f32 %v1683, 0.6931472
        %v1685 = vmul.f32 -0.5, %v1602
        %v1686 = vadd.f32 %v1685, 1.0
        %v1687 = vmul.f32 %v1686, %v1602
        %v1688 = vand.u32 2147483647, %v1602
        %vm1689 = vcmp.lt.f32.partialorder %v1688, 0.0004427343
        %v1690 = vsel %vm1689, %v1687, %v1684
        %v1691 = vadd.f32 %v1604, 1.0
        %v1692 = vlog2.pop %v1691
        %v1693 = vmul.f32 %v1692, 0.6931472
        %v1694 = vmul.f32 -0.5, %v1604
        %v1695 = vadd.f32 %v1694, 1.0
        %v1696 = vmul.f32 %v1695, %v1604
        %v1697 = vand.u32 2147483647, %v1604
        %vm1698 = vcmp.lt.f32.partialorder %v1697, 0.0004427343
        %v1699 = vsel %vm1698, %v1696, %v1693
        %v1700 = vadd.f32 %v1606, 1.0
        %v1701 = vlog2.pop %v1700
        %v1702 = vmul.f32 %v1701, 0.6931472
        %v1703 = vmul.f32 -0.5, %v1606
        %v1704 = vadd.f32 %v1703, 1.0
        %v1705 = vmul.f32 %v1704, %v1606
        %v1706 = vand.u32 2147483647, %v1606
        %vm1707 = vcmp.lt.f32.partialorder %v1706, 0.0004427343
        %v1708 = vsel %vm1707, %v1705, %v1702
        %v1709 = vadd.f32 %v1608, 1.0
        %v1710 = vlog2.pop %v1709
        %v1711 = vmul.f32 %v1710, 0.6931472
        %v1712 = vmul.f32 -0.5, %v1608
        %v1713 = vadd.f32 %v1712, 1.0
        %v1714 = vmul.f32 %v1713, %v1608
        %v1715 = vand.u32 2147483647, %v1608
        %vm1716 = vcmp.lt.f32.partialorder %v1715, 0.0004427343
        %v1717 = vsel %vm1716, %v1714, %v1711
        %v1718 = vadd.f32 %v1610, 1.0
        %v1719 = vlog2.pop %v1718
        %v1720 = vmul.f32 %v1719, 0.6931472
        %v1721 = vmul.f32 -0.5, %v1610
        %v1722 = vadd.f32 %v1721, 1.0
        %v1723 = vmul.f32 %v1722, %v1610
        %v1724 = vand.u32 2147483647, %v1610
        %vm1725 = vcmp.lt.f32.partialorder %v1724, 0.0004427343
        %v1726 = vsel %vm1725, %v1723, %v1720
        %v1727 = vadd.f32 %v1612, 1.0
        %v1728 = vlog2.pop %v1727
        %v1729 = vmul.f32 %v1728, 0.6931472
        %v1730 = vmul.f32 -0.5, %v1612
        %v1731 = vadd.f32 %v1730, 1.0
        %v1732 = vmul.f32 %v1731, %v1612
        %v1733 = vand.u32 2147483647, %v1612
        %vm1734 = vcmp.lt.f32.partialorder %v1733, 0.0004427343
        %v1735 = vsel %vm1734, %v1732, %v1729
        %v1736 = vadd.f32 %v1614, 1.0
        %v1737 = vlog2.pop %v1736
        %v1738 = vmul.f32 %v1737, 0.6931472
        %v1739 = vmul.f32 -0.5, %v1614
        %v1740 = vadd.f32 %v1739, 1.0
        %v1741 = vmul.f32 %v1740, %v1614
        %v1742 = vand.u32 2147483647, %v1614
        %vm1743 = vcmp.lt.f32.partialorder %v1742, 0.0004427343
        %v1744 = vsel %vm1743, %v1741, %v1738
        %v1745 = vadd.f32 %v1616, 1.0
        %v1746 = vlog2.pop %v1745
        %v1747 = vmul.f32 %v1746, 0.6931472
        %v1748 = vmul.f32 -0.5, %v1616
        %v1749 = vadd.f32 %v1748, 1.0
        %v1750 = vmul.f32 %v1749, %v1616
        %v1751 = vand.u32 2147483647, %v1616
        %vm1752 = vcmp.lt.f32.partialorder %v1751, 0.0004427343
        %v1753 = vsel %vm1752, %v1750, %v1747
        %v1754 = vadd.f32 %v1618, 1.0
        %v1755 = vlog2.pop %v1754
        %v1756 = vmul.f32 %v1755, 0.6931472
        %v1757 = vmul.f32 -0.5, %v1618
        %v1758 = vadd.f32 %v1757, 1.0
        %v1759 = vmul.f32 %v1758, %v1618
        %v1760 = vand.u32 2147483647, %v1618
        %vm1761 = vcmp.lt.f32.partialorder %v1760, 0.0004427343
        %v1762 = vsel %vm1761, %v1759, %v1756
        %v1763 = vadd.f32 %v1539, %v1627
        %v1764 = vadd.f32 %v1540, %v1636
        %v1765 = vadd.f32 %v1541, %v1645
        %v1766 = vadd.f32 %v1542, %v1654
        %v1767 = vadd.f32 %v1543, %v1663
        %v1768 = vadd.f32 %v1544, %v1672
        %v1769 = vadd.f32 %v1545, %v1681
        %v1770 = vadd.f32 %v1546, %v1690
        %v1771 = vadd.f32 %v1547, %v1699
        %v1772 = vadd.f32 %v1548, %v1708
        %v1773 = vadd.f32 %v1549, %v1717
        %v1774 = vadd.f32 %v1550, %v1726
        %v1775 = vadd.f32 %v1551, %v1735
        %v1776 = vadd.f32 %v1552, %v1744
        %v1777 = vadd.f32 %v1553, %v1753
        %v1778 = vadd.f32 %v1554, %v1762
        %v1779 = vld [vmem:[%s7] sm:$0xff]
        %v1780 = vld [vmem:[%s7 + $0x8] sm:$0xff]
        %v1781 = vld [vmem:[%s7 + $0x10] sm:$0xff]
        %v1782 = vld [vmem:[%s7 + $0x18] sm:$0xff]
        %v1783 = vld [vmem:[%s8] sm:$0xff]
        %v1784 = vld [vmem:[%s8 + $0x8] sm:$0xff]
        %v1785 = vld [vmem:[%s8 + $0x10] sm:$0xff]
        %v1786 = vld [vmem:[%s8 + $0x18] sm:$0xff]
        %1788 = vset.pattern.permute.xlu0 0
        %1789 = vperm.xlu0 %1788, %v1783
        %v1790 = vpop.permute.xlu0 %1789
        %1793 = vset.pattern.permute.xlu0 0
        %1794 = vperm.xlu0 %1793, %v1784
        %v1795 = vpop.permute.xlu0 %1794
        %1798 = vset.pattern.permute.xlu0 0
        %1799 = vperm.xlu0 %1798, %v1785
        %v1800 = vpop.permute.xlu0 %1799
        %1803 = vset.pattern.permute.xlu0 0
        %1804 = vperm.xlu0 %1803, %v1786
        %v1805 = vpop.permute.xlu0 %1804
        %v1808 = vsel %vm890, %v1779, 0
        %v1811 = vsel %vm890, %v1780, 0
        %v1814 = vsel %vm890, %v1781, 0
        %v1817 = vsel %vm890, %v1782, 0
        %1819 = vmatprep.subr.mxu0 %v1764
        %1820 = vmatpush1.msra.mxu0 %v1763
        %1821 = vmatprep.subr.mxu0 %v1768
        %1822 = vmatpush1.msra.mxu0 %v1767
        %1823 = vmatprep.subr.mxu0 %v1772
        %1824 = vmatpush1.msra.mxu0 %v1771
        %1825 = vmatprep.subr.mxu0 %v1776
        %1826 = vmatpush1.msra.mxu0 %v1775
        %1827 = vmatprep.subr.mxu0 0.0
        %1828 = vmatpush1.msra.mxu0 0.0
        %1829 = vmatprep.subr.mxu0 0.0
        %1830 = vmatpush1.msra.mxu0 0.0
        %1831 = vmatprep.subr.mxu0 0.0
        %1832 = vmatpush1.msra.mxu0 0.0
        %1833 = vmatprep.subr.mxu0 0.0
        %1834 = vmatpush1.msra.mxu0 0.0
        %1835 = vmatprep.subr.mxu0 0.0
        %1836 = vmatpush1.msra.mxu0 0.0
        %1837 = vmatprep.subr.mxu0 0.0
        %1838 = vmatpush1.msra.mxu0 0.0
        %1839 = vmatprep.subr.mxu0 0.0
        %1840 = vmatpush1.msra.mxu0 0.0
        %1841 = vmatprep.subr.mxu0 0.0
        %1842 = vmatpush1.msra.mxu0 0.0
        %1843 = vmatprep.subr.mxu0 0.0
        %1844 = vmatpush1.msra.mxu0 0.0
        %1845 = vmatprep.subr.mxu0 0.0
        %1846 = vmatpush1.msra.mxu0 0.0
        %1847 = vmatprep.subr.mxu0 0.0
        %1848 = vmatpush1.msra.mxu0 0.0
        %1849 = vmatprep.subr.mxu0 0.0
        %1850 = vmatpush1.msra.mxu0 0.0
        %1851 = vmatprep.subr.mxu0 0.0
        %1852 = vmatpush1.msra.mxu0 0.0
        %1853 = vmatprep.subr.mxu0 0.0
        %1854 = vmatpush1.msra.mxu0 0.0
        %1855 = vmatprep.subr.mxu0 0.0
        %1856 = vmatpush1.msra.mxu0 0.0
        %1857 = vmatprep.subr.mxu0 0.0
        %1858 = vmatpush1.msra.mxu0 0.0
        %1859 = vmatprep.subr.mxu0 0.0
        %1860 = vmatpush1.msra.mxu0 0.0
        %1861 = vmatprep.subr.mxu0 0.0
        %1862 = vmatpush1.msra.mxu0 0.0
        %1863 = vmatprep.subr.mxu0 0.0
        %1864 = vmatpush1.msra.mxu0 0.0
        %1865 = vmatprep.subr.mxu0 0.0
        %1866 = vmatpush1.msra.mxu0 0.0
        %1867 = vmatprep.subr.mxu0 0.0
        %1868 = vmatpush1.msra.mxu0 0.0
        %1869 = vmatprep.subr.mxu0 0.0
        %1870 = vmatpush1.msra.mxu0 0.0
        %1871 = vmatprep.subr.mxu0 0.0
        %1872 = vmatpush1.msra.mxu0 0.0
        %1873 = vmatprep.subr.mxu0 0.0
        %1874 = vmatpush1.msra.mxu0 0.0
        %1875 = vmatprep.subr.mxu0 0.0
        %1876 = vmatpush1.msra.mxu0 0.0
        %1877 = vmatprep.subr.mxu0 0.0
        %1878 = vmatpush1.msra.mxu0 0.0
        %1879 = vmatprep.subr.mxu0 0.0
        %1880 = vmatpush1.msra.mxu0 0.0
        %1881 = vmatprep.subr.mxu0 0.0
        %1882 = vmatpush1.msra.mxu0 0.0
        %1883 = vmatprep.mubr.f32.mxu0 0.0
        %1884 = vmatmul.mubr.f32.gmra.mrb[0].mxu0 %v1808
        %v1885 = vpop.f32.mrb[0].mxu0
        %v1886 = vadd.f32 %v1790, %v1885
        %v1887 = vpop.f32.mrb[0].mxu0
        %v1888 = vadd.f32 %v1790, %v1887
        %1889 = vmatprep.mubr.f32.mxu0 0.0
        %1890 = vmatmul.mubr.f32.gmra.mrb[0].mxu0 %v1811
        %v1891 = vpop.f32.mrb[0].mxu0
        %v1892 = vadd.f32 %v1795, %v1891
        %v1893 = vpop.f32.mrb[0].mxu0
        %v1894 = vadd.f32 %v1795, %v1893
        %1895 = vmatprep.mubr.f32.mxu0 0.0
        %1896 = vmatmul.mubr.f32.gmra.mrb[0].mxu0 %v1814
        %v1897 = vpop.f32.mrb[0].mxu0
        %v1898 = vadd.f32 %v1800, %v1897
        %v1899 = vpop.f32.mrb[0].mxu0
        %v1900 = vadd.f32 %v1800, %v1899
        %1901 = vmatprep.mubr.f32.mxu0 0.0
        %1902 = vmatmul.mubr.f32.gmra.mrb[0].mxu0 %v1817
        %v1903 = vpop.f32.mrb[0].mxu0
        %v1904 = vadd.f32 %v1805, %v1903
        %v1905 = vpop.f32.mrb[0].mxu0
        %v1906 = vadd.f32 %v1805, %v1905
        %1907 = vdwg.mxu0
        %1908 = vmatprep.subr.mxu0 %v1766
        %1909 = vmatpush1.msra.mxu0 %v1765
        %1910 = vmatprep.subr.mxu0 %v1770
        %1911 = vmatpush1.msra.mxu0 %v1769
        %1912 = vmatprep.subr.mxu0 %v1774
        %1913 = vmatpush1.msra.mxu0 %v1773
        %1914 = vmatprep.subr.mxu0 %v1778
        %1915 = vmatpush1.msra.mxu0 %v1777
        %1916 = vmatprep.subr.mxu0 0.0
        %1917 = vmatpush1.msra.mxu0 0.0
        %1918 = vmatprep.subr.mxu0 0.0
        %1919 = vmatpush1.msra.mxu0 0.0
        %1920 = vmatprep.subr.mxu0 0.0
        %1921 = vmatpush1.msra.mxu0 0.0
        %1922 = vmatprep.subr.mxu0 0.0
        %1923 = vmatpush1.msra.mxu0 0.0
        %1924 = vmatprep.subr.mxu0 0.0
        %1925 = vmatpush1.msra.mxu0 0.0
        %1926 = vmatprep.subr.mxu0 0.0
        %1927 = vmatpush1.msra.mxu0 0.0
        %1928 = vmatprep.subr.mxu0 0.0
        %1929 = vmatpush1.msra.mxu0 0.0
        %1930 = vmatprep.subr.mxu0 0.0
        %1931 = vmatpush1.msra.mxu0 0.0
        %1932 = vmatprep.subr.mxu0 0.0
        %1933 = vmatpush1.msra.mxu0 0.0
        %1934 = vmatprep.subr.mxu0 0.0
        %1935 = vmatpush1.msra.mxu0 0.0
        %1936 = vmatprep.subr.mxu0 0.0
        %1937 = vmatpush1.msra.mxu0 0.0
        %1938 = vmatprep.subr.mxu0 0.0
        %1939 = vmatpush1.msra.mxu0 0.0
        %1940 = vmatprep.subr.mxu0 0.0
        %1941 = vmatpush1.msra.mxu0 0.0
        %1942 = vmatprep.subr.mxu0 0.0
        %1943 = vmatpush1.msra.mxu0 0.0
        %1944 = vmatprep.subr.mxu0 0.0
        %1945 = vmatpush1.msra.mxu0 0.0
        %1946 = vmatprep.subr.mxu0 0.0
        %1947 = vmatpush1.msra.mxu0 0.0
        %1948 = vmatprep.subr.mxu0 0.0
        %1949 = vmatpush1.msra.mxu0 0.0
        %1950 = vmatprep.subr.mxu0 0.0
        %1951 = vmatpush1.msra.mxu0 0.0
        %1952 = vmatprep.subr.mxu0 0.0
        %1953 = vmatpush1.msra.mxu0 0.0
        %1954 = vmatprep.subr.mxu0 0.0
        %1955 = vmatpush1.msra.mxu0 0.0
        %1956 = vmatprep.subr.mxu0 0.0
        %1957 = vmatpush1.msra.mxu0 0.0
        %1958 = vmatprep.subr.mxu0 0.0
        %1959 = vmatpush1.msra.mxu0 0.0
        %1960 = vmatprep.subr.mxu0 0.0
        %1961 = vmatpush1.msra.mxu0 0.0
        %1962 = vmatprep.subr.mxu0 0.0
        %1963 = vmatpush1.msra.mxu0 0.0
        %1964 = vmatprep.subr.mxu0 0.0
        %1965 = vmatpush1.msra.mxu0 0.0
        %1966 = vmatprep.subr.mxu0 0.0
        %1967 = vmatpush1.msra.mxu0 0.0
        %1968 = vmatprep.subr.mxu0 0.0
        %1969 = vmatpush1.msra.mxu0 0.0
        %1970 = vmatprep.subr.mxu0 0.0
        %1971 = vmatpush1.msra.mxu0 0.0
        %1972 = vmatprep.mubr.f32.mxu0 0.0
        %1973 = vmatmul.mubr.f32.gmra.mrb[0].mxu0 %v1808
        %v1974 = vpop.f32.mrb[0].mxu0
        %v1975 = vadd.f32 %v1790, %v1974
        %v1976 = vpop.f32.mrb[0].mxu0
        %v1977 = vadd.f32 %v1790, %v1976
        %1978 = vmatprep.mubr.f32.mxu0 0.0
        %1979 = vmatmul.mubr.f32.gmra.mrb[0].mxu0 %v1811
        %v1980 = vpop.f32.mrb[0].mxu0
        %v1981 = vadd.f32 %v1795, %v1980
        %v1982 = vpop.f32.mrb[0].mxu0
        %v1983 = vadd.f32 %v1795, %v1982
        %1984 = vmatprep.mubr.f32.mxu0 0.0
        %1985 = vmatmul.mubr.f32.gmra.mrb[0].mxu0 %v1814
        %v1986 = vpop.f32.mrb[0].mxu0
        %v1987 = vadd.f32 %v1800, %v1986
        %v1988 = vpop.f32.mrb[0].mxu0
        %v1989 = vadd.f32 %v1800, %v1988
        %1990 = vmatprep.mubr.f32.mxu0 0.0
        %1991 = vmatmul.mubr.f32.gmra.mrb[0].mxu0 %v1817
        %v1992 = vpop.f32.mrb[0].mxu0
        %v1993 = vadd.f32 %v1805, %v1992
        %v1994 = vpop.f32.mrb[0].mxu0
        %v1995 = vadd.f32 %v1805, %v1994
        %1996 = vdwg.mxu0
        %v1997 = vmax.f32 %v1886, 0.0
        %v1998 = vmax.f32 %v1888, 0.0
        %v1999 = vmax.f32 %v1975, 0.0
        %v2000 = vmax.f32 %v1977, 0.0
        %v2001 = vmax.f32 %v1892, 0.0
        %v2002 = vmax.f32 %v1894, 0.0
        %v2003 = vmax.f32 %v1981, 0.0
        %v2004 = vmax.f32 %v1983, 0.0
        %v2005 = vmax.f32 %v1898, 0.0
        %v2006 = vmax.f32 %v1900, 0.0
        %v2007 = vmax.f32 %v1987, 0.0
        %v2008 = vmax.f32 %v1989, 0.0
        %v2009 = vmax.f32 %v1904, 0.0
        %v2010 = vmax.f32 %v1906, 0.0
        %v2011 = vmax.f32 %v1993, 0.0
        %v2012 = vmax.f32 %v1995, 0.0
        %v2013 = vand.u32 2147483647, %v1886
        %v2014 = vand.u32 2147483647, %v1888
        %v2015 = vand.u32 2147483647, %v1975
        %v2016 = vand.u32 2147483647, %v1977
        %v2017 = vand.u32 2147483647, %v1892
        %v2018 = vand.u32 2147483647, %v1894
        %v2019 = vand.u32 2147483647, %v1981
        %v2020 = vand.u32 2147483647, %v1983
        %v2021 = vand.u32 2147483647, %v1898
        %v2022 = vand.u32 2147483647, %v1900
        %v2023 = vand.u32 2147483647, %v1987
        %v2024 = vand.u32 2147483647, %v1989
        %v2025 = vand.u32 2147483647, %v1904
        %v2026 = vand.u32 2147483647, %v1906
        %v2027 = vand.u32 2147483647, %v1993
        %v2028 = vand.u32 2147483647, %v1995
        %v2029 = vsub.f32 0.0, %v2013
        %v2030 = vsub.f32 0.0, %v2014
        %v2031 = vsub.f32 0.0, %v2015
        %v2032 = vsub.f32 0.0, %v2016
        %v2033 = vsub.f32 0.0, %v2017
        %v2034 = vsub.f32 0.0, %v2018
        %v2035 = vsub.f32 0.0, %v2019
        %v2036 = vsub.f32 0.0, %v2020
        %v2037 = vsub.f32 0.0, %v2021
        %v2038 = vsub.f32 0.0, %v2022
        %v2039 = vsub.f32 0.0, %v2023
        %v2040 = vsub.f32 0.0, %v2024
        %v2041 = vsub.f32 0.0, %v2025
        %v2042 = vsub.f32 0.0, %v2026
        %v2043 = vsub.f32 0.0, %v2027
        %v2044 = vsub.f32 0.0, %v2028
        %v2045 = vmul.f32 %v2029, 1.442695
        %v2046 = vpow.pop %v2045
        %v2047 = vmul.f32 %v2030, 1.442695
        %v2048 = vpow.pop %v2047
        %v2049 = vmul.f32 %v2031, 1.442695
        %v2050 = vpow.pop %v2049
        %v2051 = vmul.f32 %v2032, 1.442695
        %v2052 = vpow.pop %v2051
        %v2053 = vmul.f32 %v2033, 1.442695
        %v2054 = vpow.pop %v2053
        %v2055 = vmul.f32 %v2034, 1.442695
        %v2056 = vpow.pop %v2055
        %v2057 = vmul.f32 %v2035, 1.442695
        %v2058 = vpow.pop %v2057
        %v2059 = vmul.f32 %v2036, 1.442695
        %v2060 = vpow.pop %v2059
        %v2061 = vmul.f32 %v2037, 1.442695
        %v2062 = vpow.pop %v2061
        %v2063 = vmul.f32 %v2038, 1.442695
        %v2064 = vpow.pop %v2063
        %v2065 = vmul.f32 %v2039, 1.442695
        %v2066 = vpow.pop %v2065
        %v2067 = vmul.f32 %v2040, 1.442695
        %v2068 = vpow.pop %v2067
        %v2069 = vmul.f32 %v2041, 1.442695
        %v2070 = vpow.pop %v2069
        %v2071 = vmul.f32 %v2042, 1.442695
        %v2072 = vpow.pop %v2071
        %v2073 = vmul.f32 %v2043, 1.442695
        %v2074 = vpow.pop %v2073
        %v2075 = vmul.f32 %v2044, 1.442695
        %v2076 = vpow.pop %v2075
        %v2077 = vadd.f32 %v2046, 1.0
        %v2078 = vlog2.pop %v2077
        %v2079 = vmul.f32 %v2078, 0.6931472
        %v2080 = vmul.f32 -0.5, %v2046
        %v2081 = vadd.f32 %v2080, 1.0
        %v2082 = vmul.f32 %v2081, %v2046
        %v2083 = vand.u32 2147483647, %v2046
        %vm2084 = vcmp.lt.f32.partialorder %v2083, 0.0004427343
        %v2085 = vsel %vm2084, %v2082, %v2079
        %v2086 = vadd.f32 %v2048, 1.0
        %v2087 = vlog2.pop %v2086
        %v2088 = vmul.f32 %v2087, 0.6931472
        %v2089 = vmul.f32 -0.5, %v2048
        %v2090 = vadd.f32 %v2089, 1.0
        %v2091 = vmul.f32 %v2090, %v2048
        %v2092 = vand.u32 2147483647, %v2048
        %vm2093 = vcmp.lt.f32.partialorder %v2092, 0.0004427343
        %v2094 = vsel %vm2093, %v2091, %v2088
        %v2095 = vadd.f32 %v2050, 1.0
        %v2096 = vlog2.pop %v2095
        %v2097 = vmul.f32 %v2096, 0.6931472
        %v2098 = vmul.f32 -0.5, %v2050
        %v2099 = vadd.f32 %v2098, 1.0
        %v2100 = vmul.f32 %v2099, %v2050
        %v2101 = vand.u32 2147483647, %v2050
        %vm2102 = vcmp.lt.f32.partialorder %v2101, 0.0004427343
        %v2103 = vsel %vm2102, %v2100, %v2097
        %v2104 = vadd.f32 %v2052, 1.0
        %v2105 = vlog2.pop %v2104
        %v2106 = vmul.f32 %v2105, 0.6931472
        %v2107 = vmul.f32 -0.5, %v2052
        %v2108 = vadd.f32 %v2107, 1.0
        %v2109 = vmul.f32 %v2108, %v2052
        %v2110 = vand.u32 2147483647, %v2052
        %vm2111 = vcmp.lt.f32.partialorder %v2110, 0.0004427343
        %v2112 = vsel %vm2111, %v2109, %v2106
        %v2113 = vadd.f32 %v2054, 1.0
        %v2114 = vlog2.pop %v2113
        %v2115 = vmul.f32 %v2114, 0.6931472
        %v2116 = vmul.f32 -0.5, %v2054
        %v2117 = vadd.f32 %v2116, 1.0
        %v2118 = vmul.f32 %v2117, %v2054
        %v2119 = vand.u32 2147483647, %v2054
        %vm2120 = vcmp.lt.f32.partialorder %v2119, 0.0004427343
        %v2121 = vsel %vm2120, %v2118, %v2115
        %v2122 = vadd.f32 %v2056, 1.0
        %v2123 = vlog2.pop %v2122
        %v2124 = vmul.f32 %v2123, 0.6931472
        %v2125 = vmul.f32 -0.5, %v2056
        %v2126 = vadd.f32 %v2125, 1.0
        %v2127 = vmul.f32 %v2126, %v2056
        %v2128 = vand.u32 2147483647, %v2056
        %vm2129 = vcmp.lt.f32.partialorder %v2128, 0.0004427343
        %v2130 = vsel %vm2129, %v2127, %v2124
        %v2131 = vadd.f32 %v2058, 1.0
        %v2132 = vlog2.pop %v2131
        %v2133 = vmul.f32 %v2132, 0.6931472
        %v2134 = vmul.f32 -0.5, %v2058
        %v2135 = vadd.f32 %v2134, 1.0
        %v2136 = vmul.f32 %v2135, %v2058
        %v2137 = vand.u32 2147483647, %v2058
        %vm2138 = vcmp.lt.f32.partialorder %v2137, 0.0004427343
        %v2139 = vsel %vm2138, %v2136, %v2133
        %v2140 = vadd.f32 %v2060, 1.0
        %v2141 = vlog2.pop %v2140
        %v2142 = vmul.f32 %v2141, 0.6931472
        %v2143 = vmul.f32 -0.5, %v2060
        %v2144 = vadd.f32 %v2143, 1.0
        %v2145 = vmul.f32 %v2144, %v2060
        %v2146 = vand.u32 2147483647, %v2060
        %vm2147 = vcmp.lt.f32.partialorder %v2146, 0.0004427343
        %v2148 = vsel %vm2147, %v2145, %v2142
        %v2149 = vadd.f32 %v2062, 1.0
        %v2150 = vlog2.pop %v2149
        %v2151 = vmul.f32 %v2150, 0.6931472
        %v2152 = vmul.f32 -0.5, %v2062
        %v2153 = vadd.f32 %v2152, 1.0
        %v2154 = vmul.f32 %v2153, %v2062
        %v2155 = vand.u32 2147483647, %v2062
        %vm2156 = vcmp.lt.f32.partialorder %v2155, 0.0004427343
        %v2157 = vsel %vm2156, %v2154, %v2151
        %v2158 = vadd.f32 %v2064, 1.0
        %v2159 = vlog2.pop %v2158
        %v2160 = vmul.f32 %v2159, 0.6931472
        %v2161 = vmul.f32 -0.5, %v2064
        %v2162 = vadd.f32 %v2161, 1.0
        %v2163 = vmul.f32 %v2162, %v2064
        %v2164 = vand.u32 2147483647, %v2064
        %vm2165 = vcmp.lt.f32.partialorder %v2164, 0.0004427343
        %v2166 = vsel %vm2165, %v2163, %v2160
        %v2167 = vadd.f32 %v2066, 1.0
        %v2168 = vlog2.pop %v2167
        %v2169 = vmul.f32 %v2168, 0.6931472
        %v2170 = vmul.f32 -0.5, %v2066
        %v2171 = vadd.f32 %v2170, 1.0
        %v2172 = vmul.f32 %v2171, %v2066
        %v2173 = vand.u32 2147483647, %v2066
        %vm2174 = vcmp.lt.f32.partialorder %v2173, 0.0004427343
        %v2175 = vsel %vm2174, %v2172, %v2169
        %v2176 = vadd.f32 %v2068, 1.0
        %v2177 = vlog2.pop %v2176
        %v2178 = vmul.f32 %v2177, 0.6931472
        %v2179 = vmul.f32 -0.5, %v2068
        %v2180 = vadd.f32 %v2179, 1.0
        %v2181 = vmul.f32 %v2180, %v2068
        %v2182 = vand.u32 2147483647, %v2068
        %vm2183 = vcmp.lt.f32.partialorder %v2182, 0.0004427343
        %v2184 = vsel %vm2183, %v2181, %v2178
        %v2185 = vadd.f32 %v2070, 1.0
        %v2186 = vlog2.pop %v2185
        %v2187 = vmul.f32 %v2186, 0.6931472
        %v2188 = vmul.f32 -0.5, %v2070
        %v2189 = vadd.f32 %v2188, 1.0
        %v2190 = vmul.f32 %v2189, %v2070
        %v2191 = vand.u32 2147483647, %v2070
        %vm2192 = vcmp.lt.f32.partialorder %v2191, 0.0004427343
        %v2193 = vsel %vm2192, %v2190, %v2187
        %v2194 = vadd.f32 %v2072, 1.0
        %v2195 = vlog2.pop %v2194
        %v2196 = vmul.f32 %v2195, 0.6931472
        %v2197 = vmul.f32 -0.5, %v2072
        %v2198 = vadd.f32 %v2197, 1.0
        %v2199 = vmul.f32 %v2198, %v2072
        %v2200 = vand.u32 2147483647, %v2072
        %vm2201 = vcmp.lt.f32.partialorder %v2200, 0.0004427343
        %v2202 = vsel %vm2201, %v2199, %v2196
        %v2203 = vadd.f32 %v2074, 1.0
        %v2204 = vlog2.pop %v2203
        %v2205 = vmul.f32 %v2204, 0.6931472
        %v2206 = vmul.f32 -0.5, %v2074
        %v2207 = vadd.f32 %v2206, 1.0
        %v2208 = vmul.f32 %v2207, %v2074
        %v2209 = vand.u32 2147483647, %v2074
        %vm2210 = vcmp.lt.f32.partialorder %v2209, 0.0004427343
        %v2211 = vsel %vm2210, %v2208, %v2205
        %v2212 = vadd.f32 %v2076, 1.0
        %v2213 = vlog2.pop %v2212
        %v2214 = vmul.f32 %v2213, 0.6931472
        %v2215 = vmul.f32 -0.5, %v2076
        %v2216 = vadd.f32 %v2215, 1.0
        %v2217 = vmul.f32 %v2216, %v2076
        %v2218 = vand.u32 2147483647, %v2076
        %vm2219 = vcmp.lt.f32.partialorder %v2218, 0.0004427343
        %v2220 = vsel %vm2219, %v2217, %v2214
        %v2221 = vadd.f32 %v1997, %v2085
        %v2222 = vadd.f32 %v1998, %v2094
        %v2223 = vadd.f32 %v1999, %v2103
        %v2224 = vadd.f32 %v2000, %v2112
        %v2225 = vadd.f32 %v2001, %v2121
        %v2226 = vadd.f32 %v2002, %v2130
        %v2227 = vadd.f32 %v2003, %v2139
        %v2228 = vadd.f32 %v2004, %v2148
        %v2229 = vadd.f32 %v2005, %v2157
        %v2230 = vadd.f32 %v2006, %v2166
        %v2231 = vadd.f32 %v2007, %v2175
        %v2232 = vadd.f32 %v2008, %v2184
        %v2233 = vadd.f32 %v2009, %v2193
        %v2234 = vadd.f32 %v2010, %v2202
        %v2235 = vadd.f32 %v2011, %v2211
        %v2236 = vadd.f32 %v2012, %v2220
        %v2237 = vld [vmem:[%s9] sm:$0x3]
        %v2238 = vld [vmem:[%s10] sm:$0x3]
        %2240 = vset.pattern.permute.xlu0 0
        %2241 = vperm.xlu0 %2240, %v2238
        %v2242 = vpop.permute.xlu0 %2241
        %v2245 = vsel %vm890, %v2237, 0
        %2247 = vmatprep.subr.mxu0 %v2222
        %2248 = vmatpush1.msra.mxu0 %v2221
        %2249 = vmatprep.subr.mxu0 %v2226
        %2250 = vmatpush1.msra.mxu0 %v2225
        %2251 = vmatprep.subr.mxu0 %v2230
        %2252 = vmatpush1.msra.mxu0 %v2229
        %2253 = vmatprep.subr.mxu0 %v2234
        %2254 = vmatpush1.msra.mxu0 %v2233
        %2255 = vmatprep.subr.mxu0 0.0
        %2256 = vmatpush1.msra.mxu0 0.0
        %2257 = vmatprep.subr.mxu0 0.0
        %2258 = vmatpush1.msra.mxu0 0.0
        %2259 = vmatprep.subr.mxu0 0.0
        %2260 = vmatpush1.msra.mxu0 0.0
        %2261 = vmatprep.subr.mxu0 0.0
        %2262 = vmatpush1.msra.mxu0 0.0
        %2263 = vmatprep.subr.mxu0 0.0
        %2264 = vmatpush1.msra.mxu0 0.0
        %2265 = vmatprep.subr.mxu0 0.0
        %2266 = vmatpush1.msra.mxu0 0.0
        %2267 = vmatprep.subr.mxu0 0.0
        %2268 = vmatpush1.msra.mxu0 0.0
        %2269 = vmatprep.subr.mxu0 0.0
        %2270 = vmatpush1.msra.mxu0 0.0
        %2271 = vmatprep.subr.mxu0 0.0
        %2272 = vmatpush1.msra.mxu0 0.0
        %2273 = vmatprep.subr.mxu0 0.0
        %2274 = vmatpush1.msra.mxu0 0.0
        %2275 = vmatprep.subr.mxu0 0.0
        %2276 = vmatpush1.msra.mxu0 0.0
        %2277 = vmatprep.subr.mxu0 0.0
        %2278 = vmatpush1.msra.mxu0 0.0
        %2279 = vmatprep.subr.mxu0 0.0
        %2280 = vmatpush1.msra.mxu0 0.0
        %2281 = vmatprep.subr.mxu0 0.0
        %2282 = vmatpush1.msra.mxu0 0.0
        %2283 = vmatprep.subr.mxu0 0.0
        %2284 = vmatpush1.msra.mxu0 0.0
        %2285 = vmatprep.subr.mxu0 0.0
        %2286 = vmatpush1.msra.mxu0 0.0
        %2287 = vmatprep.subr.mxu0 0.0
        %2288 = vmatpush1.msra.mxu0 0.0
        %2289 = vmatprep.subr.mxu0 0.0
        %2290 = vmatpush1.msra.mxu0 0.0
        %2291 = vmatprep.subr.mxu0 0.0
        %2292 = vmatpush1.msra.mxu0 0.0
        %2293 = vmatprep.subr.mxu0 0.0
        %2294 = vmatpush1.msra.mxu0 0.0
        %2295 = vmatprep.subr.mxu0 0.0
        %2296 = vmatpush1.msra.mxu0 0.0
        %2297 = vmatprep.subr.mxu0 0.0
        %2298 = vmatpush1.msra.mxu0 0.0
        %2299 = vmatprep.subr.mxu0 0.0
        %2300 = vmatpush1.msra.mxu0 0.0
        %2301 = vmatprep.subr.mxu0 0.0
        %2302 = vmatpush1.msra.mxu0 0.0
        %2303 = vmatprep.subr.mxu0 0.0
        %2304 = vmatpush1.msra.mxu0 0.0
        %2305 = vmatprep.subr.mxu0 0.0
        %2306 = vmatpush1.msra.mxu0 0.0
        %2307 = vmatprep.subr.mxu0 0.0
        %2308 = vmatpush1.msra.mxu0 0.0
        %2309 = vmatprep.subr.mxu0 0.0
        %2310 = vmatpush1.msra.mxu0 0.0
        %2311 = vmatprep.mubr.f32.mxu0 0.0
        %2312 = vmatmul.mubr.f32.gmra.mrb[0].mxu0 %v2245
        %v2313 = vpop.f32.mrb[0].mxu0
        %v2314 = vadd.f32 %v2242, %v2313
        %v2315 = vpop.f32.mrb[0].mxu0
        %v2316 = vadd.f32 %v2242, %v2315
        %2317 = vdwg.mxu0
        %2318 = vmatprep.subr.mxu0 %v2224
        %2319 = vmatpush1.msra.mxu0 %v2223
        %2320 = vmatprep.subr.mxu0 %v2228
        %2321 = vmatpush1.msra.mxu0 %v2227
        %2322 = vmatprep.subr.mxu0 %v2232
        %2323 = vmatpush1.msra.mxu0 %v2231
        %2324 = vmatprep.subr.mxu0 %v2236
        %2325 = vmatpush1.msra.mxu0 %v2235
        %2326 = vmatprep.subr.mxu0 0.0
        %2327 = vmatpush1.msra.mxu0 0.0
        %2328 = vmatprep.subr.mxu0 0.0
        %2329 = vmatpush1.msra.mxu0 0.0
        %2330 = vmatprep.subr.mxu0 0.0
        %2331 = vmatpush1.msra.mxu0 0.0
        %2332 = vmatprep.subr.mxu0 0.0
        %2333 = vmatpush1.msra.mxu0 0.0
        %2334 = vmatprep.subr.mxu0 0.0
        %2335 = vmatpush1.msra.mxu0 0.0
        %2336 = vmatprep.subr.mxu0 0.0
        %2337 = vmatpush1.msra.mxu0 0.0
        %2338 = vmatprep.subr.mxu0 0.0
        %2339 = vmatpush1.msra.mxu0 0.0
        %2340 = vmatprep.subr.mxu0 0.0
        %2341 = vmatpush1.msra.mxu0 0.0
        %2342 = vmatprep.subr.mxu0 0.0
        %2343 = vmatpush1.msra.mxu0 0.0
        %2344 = vmatprep.subr.mxu0 0.0
        %2345 = vmatpush1.msra.mxu0 0.0
        %2346 = vmatprep.subr.mxu0 0.0
        %2347 = vmatpush1.msra.mxu0 0.0
        %2348 = vmatprep.subr.mxu0 0.0
        %2349 = vmatpush1.msra.mxu0 0.0
        %2350 = vmatprep.subr.mxu0 0.0
        %2351 = vmatpush1.msra.mxu0 0.0
        %2352 = vmatprep.subr.mxu0 0.0
        %2353 = vmatpush1.msra.mxu0 0.0
        %2354 = vmatprep.subr.mxu0 0.0
        %2355 = vmatpush1.msra.mxu0 0.0
        %2356 = vmatprep.subr.mxu0 0.0
        %2357 = vmatpush1.msra.mxu0 0.0
        %2358 = vmatprep.subr.mxu0 0.0
        %2359 = vmatpush1.msra.mxu0 0.0
        %2360 = vmatprep.subr.mxu0 0.0
        %2361 = vmatpush1.msra.mxu0 0.0
        %2362 = vmatprep.subr.mxu0 0.0
        %2363 = vmatpush1.msra.mxu0 0.0
        %2364 = vmatprep.subr.mxu0 0.0
        %2365 = vmatpush1.msra.mxu0 0.0
        %2366 = vmatprep.subr.mxu0 0.0
        %2367 = vmatpush1.msra.mxu0 0.0
        %2368 = vmatprep.subr.mxu0 0.0
        %2369 = vmatpush1.msra.mxu0 0.0
        %2370 = vmatprep.subr.mxu0 0.0
        %2371 = vmatpush1.msra.mxu0 0.0
        %2372 = vmatprep.subr.mxu0 0.0
        %2373 = vmatpush1.msra.mxu0 0.0
        %2374 = vmatprep.subr.mxu0 0.0
        %2375 = vmatpush1.msra.mxu0 0.0
        %2376 = vmatprep.subr.mxu0 0.0
        %2377 = vmatpush1.msra.mxu0 0.0
        %2378 = vmatprep.subr.mxu0 0.0
        %2379 = vmatpush1.msra.mxu0 0.0
        %2380 = vmatprep.subr.mxu0 0.0
        %2381 = vmatpush1.msra.mxu0 0.0
        %2382 = vmatprep.mubr.f32.mxu0 0.0
        %2383 = vmatmul.mubr.f32.gmra.mrb[0].mxu0 %v2245
        %v2384 = vpop.f32.mrb[0].mxu0
        %v2385 = vadd.f32 %v2242, %v2384
        %v2386 = vpop.f32.mrb[0].mxu0
        %v2387 = vadd.f32 %v2242, %v2386
        %2388 = vdwg.mxu0
        %v2393 = vcombine.low %v2314, %v2316
        %v2394 = vcombine.low %v2385, %v2387
        %v2396 = vunpack.c.l.s4 1983009808
        %v2397 = vunpack.c.0.s8 %v2396
        %v2398 = vlaneseq
        %v2399 = vshrl.u32 %v2398, 7
        %v2400 = vsub.s32 %v2397, %v2399
        %v2401 = vrot.slane %v2393, %v2400
        %v2403 = vunpack.c.l.s4 1983009808
        %v2404 = vunpack.c.0.s8 %v2403
        %v2405 = vlaneseq
        %v2406 = vshrl.u32 %v2405, 7
        %v2407 = vsub.s32 %v2404, %v2406
        %v2408 = vrot.slane %v2394, %v2407
        %v2409 = vcombine.low %v2401, %v2408
        %2411 = vst [vmem:[%s380] sm:$0xff] %v2409
        %s2412 = sand.u32 %s269, 1
        %s2413 = scalar_lea.sflag [#allocation3], %s2412
        %s2414 = sand.u32 %s269, 1
        %s2415 = smul.addr %s2414, 8
        %s2416 = scalar_lea.vmem [#allocation2], %s2415
        // Predicated region
        $region65: #{classical_nn_forward.1} parent=63 // pred_check
          %p2417 = pneg %p279
        $region66: #{classical_nn_forward.1} parent=63 // pred_check_branch
          %2419 = sbr.rel (%p2417) target = $region68
        $region67: #{classical_nn_forward.1} parent=63 // pred_region
          %s2420 = smul.u32 4, %s25
          %s2422 = ssub.s32 128, 128
          %2423 = vsyncadd %s2413, %s2422
          %s2424 = smul.addr %s2420, 32
          %s2425 = scalar_lea.hbm %s11, %s2424
          %s2427 = sshll.u32 %s2416, 4
          %s2428 = int_to_ptr.vmem [resolvable:$true] %s2427
          %2430 = dma.vmem_to_hbm [thread:$0]  %s2428, 128, %s2425, %s2413
        $region68: #{classical_nn_forward.1} parent=63 // pred_fallthru
          _
      $region64: #{classical_nn_forward.1} parent=5 // pred_fallthru
        _
      %p2431 = scmp.le.s32.totalorder 2, %s20
      // Predicated region
      $region69: #{classical_nn_forward.1} parent=5 // pred_check
        %p2432 = pneg %p2431
      $region70: #{classical_nn_forward.1} parent=5 // pred_check_branch
        %2434 = sbr.rel (%p2432) target = $region72
      $region71: #{classical_nn_forward.1} parent=5 // pred_region
        %s2435 = ssub.s32 %s20, 2
        // Predicated region
        $region73: #{classical_nn_forward.1} parent=71 // pred_check
          %p2436 = pneg %p285
        $region74: #{classical_nn_forward.1} parent=71 // pred_check_branch
          %2438 = sbr.rel (%p2436) target = $region76
        $region75: #{classical_nn_forward.1} parent=71 // pred_region
          %s2439 = sand.u32 %s270, 1
          %s2440 = scalar_lea.sflag [#allocation3], %s2439
          %s2441 = sand.u32 %s270, 1
          %s2442 = smul.addr %s2441, 8
          %s2443 = scalar_lea.vmem [#allocation2], %s2442
          %2444 = dma.done %s2440, 128
        $region76: #{classical_nn_forward.1} parent=71 // pred_fallthru
          _
      $region72: #{classical_nn_forward.1} parent=5 // pred_fallthru
        _
    $region6: #{classical_nn_forward.1} parent=1 // loop_footer
      %s24 = sadd.s32 1, %s20
    $region7: #{classical_nn_forward.1} parent=1 // loop_footer_branch
      %19 = sbr.rel target = $region3
    $region8: #{classical_nn_forward.1} parent=1 // loop_exit
      _
    %2445 = vsyncpa [#allocation3], 1
    %s2446 = scalar_lea.sflag [#allocation3], 1
    %2447 = vsyncpa %s2446, 1

</llo_original>
